<compile_context>
chip_gen: v7x
topology: tpu7x:2x2x1
jax: 0.10.0
libtpu: 0.0.40
codegen_flags: <defaults>
</compile_context>

<pallas_src>
import functools
import math

import jax
import jax.numpy as jnp
from jax import lax
from jax.experimental import pallas as pl
from jax.experimental.pallas import tpu as pltpu

CLS_ROWS = 8  # sublane-aligned row count containing the CLS token (row 0)


# ----------------------------------------------------------------------------
# In-kernel helpers (traced inside the Pallas kernel body)
# ----------------------------------------------------------------------------

def _layernorm(x, g, b, eps=1e-12):
    mu = jnp.mean(x, axis=-1, keepdims=True)
    xc = x - mu
    var = jnp.mean(xc * xc, axis=-1, keepdims=True)
    return xc * lax.rsqrt(var + eps) * g + b


def _gelu_tanh(y):
    c = 0.7978845608028654  # sqrt(2/pi)
    return 0.5 * y * (1.0 + jnp.tanh(c * (y + 0.044715 * y * y * y)))


def _dot_nt(a, b):
    """(m,k) x (n,k) -> (m,n) on the MXU, f32 accumulation, no transpose op."""
    return lax.dot_general(a, b, (((1,), (1,)), ((), ())),
                           preferred_element_type=jnp.float32)


# ----------------------------------------------------------------------------
# Fused whole-encoder kernel: grid = (batch tile, transformer layer)
# ----------------------------------------------------------------------------

def _encoder_kernel(mask_ref, h0_ref,
                    qkv_w_ref, qkv_b_ref, o_w_ref, o_b_ref,
                    sa_g_ref, sa_b_ref,
                    f1_w_ref, f1_b_ref, f2_w_ref, f2_b_ref,
                    out_g_ref, out_b_ref,
                    clf_w_ref, clf_b_ref,
                    logits_ref, h_vmem,
                    *, S, H, Dh, scale, n_layers, gelu_bf16):
    l = pl.program_id(1)                      # layer index (inner, "arbitrary")
    D = H * Dh

    # Layer 0: pull this batch tile's (already LayerNormed) embeddings into the
    # resident VMEM hidden state.
    @pl.when(l == 0)
    def _():
        h_vmem[...] = h0_ref[...]

    h = h_vmem[...]                           # (S, D) f32, resident across layers
    mask = mask_ref[0]                        # (1, S) additive key mask (0 / -1e9)

    # ---- fused QKV projection: one lane-dense (S, 3D) MXU matmul ----
    qkv = jnp.dot(h.astype(jnp.bfloat16), qkv_w_ref[0],
                  preferred_element_type=jnp.float32) + qkv_b_ref[0]

    # ---- multi-head self-attention ----
    # One batch element per grid step -> every head is a pair of clean 2-D
    # matmuls; the merge-heads concatenate is folded into the output
    # projection:  ctx @ W_o == sum_h ctx_h @ W_o[h*Dh:(h+1)*Dh, :].
    o_w = o_w_ref[0]                          # (D, D) bf16
    attn = jnp.zeros((S, D), jnp.float32)
    for hh in range(H):                       # static unroll, H is small
        lo = hh * Dh
        qh = qkv[:, lo:lo + Dh].astype(jnp.bfloat16)
        kh = qkv[:, D + lo:D + lo + Dh].astype(jnp.bfloat16)
        vh = qkv[:, 2 * D + lo:2 * D + lo + Dh].astype(jnp.bfloat16)
        s = _dot_nt(qh, kh) * scale + mask    # (S, S)
        s = s - jnp.max(s, axis=-1, keepdims=True)
        p = jnp.exp(s)
        p = p * pl.reciprocal(jnp.sum(p, axis=-1, keepdims=True), approx=True)
        ctx = jnp.dot(p.astype(jnp.bfloat16), vh,
                      preferred_element_type=jnp.float32)     # (S, Dh)
        attn = attn + jnp.dot(ctx.astype(jnp.bfloat16), o_w[lo:lo + Dh, :],
                              preferred_element_type=jnp.float32)
    attn = attn + o_b_ref[0]
    h = _layernorm(h + attn, sa_g_ref[0], sa_b_ref[0])

    # ---- fused FFN: FF1 -> GELU -> FF2 -> residual + LayerNorm ----
    y = jnp.dot(h.astype(jnp.bfloat16), f1_w_ref[0],
                preferred_element_type=jnp.float32) + f1_b_ref[0]
    if gelu_bf16:                             # bf16 VPU/EUP exists on v6e / v7x
        y = _gelu_tanh(y.astype(jnp.bfloat16))
    else:                                     # keep f32 on v5e and older
        y = _gelu_tanh(y)
    y = jnp.dot(y.astype(jnp.bfloat16), f2_w_ref[0],
                preferred_element_type=jnp.float32) + f2_b_ref[0]
    h = _layernorm(h + y, out_g_ref[0], out_b_ref[0])

    h_vmem[...] = h

    # ---- last layer: classifier head on the CLS token only ----
    @pl.when(l == n_layers - 1)
    def _():
        # Dropout(0.3) is identity at inference.  Only the first CLS_ROWS
        # (sublane-aligned) rows are projected; the wrapper keeps row 0.
        cls = h[0:CLS_ROWS, :].astype(jnp.bfloat16)
        logits_ref[...] = (jnp.dot(cls, clf_w_ref[...],
                                   preferred_element_type=jnp.float32)
                           + clf_b_ref[...])


# ----------------------------------------------------------------------------
# Synthetic DistilBERT-style parameters (deterministic, stacked per layer)
# ----------------------------------------------------------------------------

def init_params(key, *, vocab, max_pos, d_model, n_heads, d_ff, n_layers,
                num_labels, label_pad=128):
    D, F, L = d_model, d_ff, n_layers

    def nxt():
        nonlocal key
        key, sub = jax.random.split(key)
        return sub

    def w(shape):
        return jax.random.normal(nxt(), shape, jnp.float32) * 0.02

    clf_w = jnp.zeros((D, label_pad), jnp.float32)
    clf_w = clf_w.at[:, :num_labels].set(w((D, num_labels)))

    return {
        "word_emb": w((vocab, D)),
        "pos_emb": w((max_pos, D)),
        "emb_ln_g": jnp.ones((1, D), jnp.float32),
        "emb_ln_b": jnp.zeros((1, D), jnp.float32),
        # per-layer weights stacked on a leading layer axis; matmul weights bf16
        "qkv_w": w((L, D, 3 * D)).astype(jnp.bfloat16),
        "qkv_b": jnp.zeros((L, 1, 3 * D), jnp.float32),
        "o_w": w((L, D, D)).astype(jnp.bfloat16),
        "o_b": jnp.zeros((L, 1, D), jnp.float32),
        "sa_ln_g": jnp.ones((L, 1, D), jnp.float32),
        "sa_ln_b": jnp.zeros((L, 1, D), jnp.float32),
        "ff1_w": w((L, D, F)).astype(jnp.bfloat16),
        "ff1_b": jnp.zeros((L, 1, F), jnp.float32),
        "ff2_w": w((L, F, D)).astype(jnp.bfloat16),
        "ff2_b": jnp.zeros((L, 1, D), jnp.float32),
        "out_ln_g": jnp.ones((L, 1, D), jnp.float32),
        "out_ln_b": jnp.zeros((L, 1, D), jnp.float32),
        "clf_w": clf_w.astype(jnp.bfloat16),
        "clf_b": jnp.zeros((1, label_pad), jnp.float32),
    }


# ----------------------------------------------------------------------------
# VMEM budget (double-buffered layer weights + per-tile activations + scratch)
# ----------------------------------------------------------------------------

def _vmem_limit_bytes(S, D, F, n_pad):
    bf16, f32 = 2, 4
    per_layer = (bf16 * (3 * D * D + D * D + 2 * D * F)
                 + f32 * (3 * D + D + F + D + 4 * D))          # weights+bias+LN
    streamed = 2 * per_layer                                   # double-buffered
    resident = f32 * 2 * S * D                                 # h scratch + h0
    acts = f32 * (3 * S * D + S * F + 4 * S * D + 2 * S * S)   # qkv/ffn/temps
    head = bf16 * D * n_pad + f32 * (n_pad + CLS_ROWS * n_pad)
    return int(streamed + resident + acts + head) + (8 << 20)  # headroom


# ----------------------------------------------------------------------------
# Forward pass: embedding gather + LN + mask in JAX, everything else fused
# ----------------------------------------------------------------------------

def life_advisor_forward(params, input_ids, attention_mask, *, n_heads,
                         n_layers, num_labels):
    B, S = input_ids.shape
    D = params["word_emb"].shape[1]
    F = params["ff1_w"].shape[-1]
    N_pad = params["clf_w"].shape[-1]
    Dh = D // n_heads
    scale = 1.0 / math.sqrt(Dh)

    assert D % 128 == 0 and F % 128 == 0 and N_pad % 128 == 0
    assert S % 8 == 0 and S >= CLS_ROWS

    # Glue: embedding gather + positions + embedding LayerNorm (moved out of the
    # kernel so no dead (M, D) input competes with weight streaming in VMEM).
    emb = params["word_emb"][input_ids] + params["pos_emb"][:S][None, :, :]
    mu = jnp.mean(emb, axis=-1, keepdims=True)
    var = jnp.mean((emb - mu) ** 2, axis=-1, keepdims=True)
    h0 = ((emb - mu) * lax.rsqrt(var + 1e-12)
          * params["emb_ln_g"] + params["emb_ln_b"]).reshape(B * S, D)
    add_mask = ((1.0 - attention_mask.astype(jnp.float32)) * -1e9)[:, None, :]

    # bf16 elementwise math only where the VPU/EUP supports it.
    kind = jax.devices()[0].device_kind.lower()
    gelu_bf16 = ("v6" in kind) or ("v7" in kind)

    kernel = functools.partial(_encoder_kernel, S=S, H=n_heads, Dh=Dh,
                               scale=scale, n_layers=n_layers,
                               gelu_bf16=gelu_bf16)

    per_layer3 = lambda b, l: (l, 0, 0)
    shared2 = lambda b, l: (0, 0)
    batch2 = lambda b, l: (b, 0)
    batch3 = lambda b, l: (b, 0, 0)

    logits_all = pl.pallas_call(
        kernel,
        out_shape=jax.ShapeDtypeStruct((B * CLS_ROWS, N_pad), jnp.float32),
        grid=(B, n_layers),                            # (batch tile, layer)
        in_specs=[
            pl.BlockSpec((1, 1, S), batch3),           # additive key mask
            pl.BlockSpec((S, D), batch2),              # pre-LayerNormed embeddings
            pl.BlockSpec((1, D, 3 * D), per_layer3),   # fused QKV weight
            pl.BlockSpec((1, 1, 3 * D), per_layer3),   # fused QKV bias
            pl.BlockSpec((1, D, D), per_layer3),       # attn out weight
            pl.BlockSpec((1, 1, D), per_layer3),       # attn out bias
            pl.BlockSpec((1, 1, D), per_layer3),       # sa LN gamma
            pl.BlockSpec((1, 1, D), per_layer3),       # sa LN beta
            pl.BlockSpec((1, D, F), per_layer3),       # FF1 weight
            pl.BlockSpec((1, 1, F), per_layer3),       # FF1 bias
            pl.BlockSpec((1, F, D), per_layer3),       # FF2 weight
            pl.BlockSpec((1, 1, D), per_layer3),       # FF2 bias
            pl.BlockSpec((1, 1, D), per_layer3),       # out LN gamma
            pl.BlockSpec((1, 1, D), per_layer3),       # out LN beta
            pl.BlockSpec((D, N_pad), shared2),         # classifier weight (padded)
            pl.BlockSpec((1, N_pad), shared2),         # classifier bias (padded)
        ],
        out_specs=pl.BlockSpec((CLS_ROWS, N_pad), batch2),
        scratch_shapes=[pltpu.VMEM((S, D), jnp.float32)],   # resident hidden state
        compiler_params=pltpu.CompilerParams(
            dimension_semantics=("parallel", "arbitrary"),  # batch ||, layers seq
            vmem_limit_bytes=max(_vmem_limit_bytes(S, D, F, N_pad), 32 << 20)),
    )(add_mask, h0,
      params["qkv_w"], params["qkv_b"], params["o_w"], params["o_b"],
      params["sa_ln_g"], params["sa_ln_b"],
      params["ff1_w"], params["ff1_b"], params["ff2_w"], params["ff2_b"],
      params["out_ln_g"], params["out_ln_b"],
      params["clf_w"], params["clf_b"])

    # CLS-token pooling (row 0 of each batch tile) + strip lane padding.
    return logits_all.reshape(B, CLS_ROWS, N_pad)[:, 0, :num_labels]


# ----------------------------------------------------------------------------
# Main
# ----------------------------------------------------------------------------

if __name__ == "__main__":
    # Small, lane-dense synthetic DistilBERT config.
    VOCAB, MAX_POS = 100, 32
    B, S = 2, 16
    D, H, FFN, LAYERS = 128, 4, 256, 2
    NUM_LABELS = 3

    root = jax.random.PRNGKey(0)
    k_param, k_ids = jax.random.split(root)

    params = init_params(k_param, vocab=VOCAB, max_pos=MAX_POS, d_model=D,
                         n_heads=H, d_ff=FFN, n_layers=LAYERS,
                         num_labels=NUM_LABELS)

    input_ids = jax.random.randint(k_ids, (B, S), 0, VOCAB, dtype=jnp.int32)
    # Simple padding mask: second example has 4 padded positions.
    attention_mask = jnp.ones((B, S), jnp.int32)
    attention_mask = attention_mask.at[1, S - 4:].set(0)

    fwd = jax.jit(functools.partial(life_advisor_forward, n_heads=H,
                                    n_layers=LAYERS, num_labels=NUM_LABELS))
    logits = jax.block_until_ready(fwd(params, input_ids, attention_mask))

    assert logits.shape == (B, NUM_LABELS)
    assert bool(jnp.all(jnp.isfinite(logits)))
    print("KERNEL_OK")
</pallas_src>

<mosaic_0001>
module attributes {stable_mosaic.version = 11 : i64} {
  func.func @_encoder_kernel(%arg0: i32, %arg1: i32, %arg2: memref<1x1x16xf32, #tpu.memory_space<vmem>>, %arg3: memref<16x128xf32, #tpu.memory_space<vmem>>, %arg4: memref<1x128x384xbf16, #tpu.memory_space<vmem>>, %arg5: memref<1x1x384xf32, #tpu.memory_space<vmem>>, %arg6: memref<1x128x128xbf16, #tpu.memory_space<vmem>>, %arg7: memref<1x1x128xf32, #tpu.memory_space<vmem>>, %arg8: memref<1x1x128xf32, #tpu.memory_space<vmem>>, %arg9: memref<1x1x128xf32, #tpu.memory_space<vmem>>, %arg10: memref<1x128x256xbf16, #tpu.memory_space<vmem>>, %arg11: memref<1x1x256xf32, #tpu.memory_space<vmem>>, %arg12: memref<1x256x128xbf16, #tpu.memory_space<vmem>>, %arg13: memref<1x1x128xf32, #tpu.memory_space<vmem>>, %arg14: memref<1x1x128xf32, #tpu.memory_space<vmem>>, %arg15: memref<1x1x128xf32, #tpu.memory_space<vmem>>, %arg16: memref<128x128xbf16, #tpu.memory_space<vmem>>, %arg17: memref<1x128xf32, #tpu.memory_space<vmem>>, %arg18: memref<8x128xf32, #tpu.memory_space<vmem>>, %arg19: memref<16x128xf32, #tpu.memory_space<vmem>>) attributes {dimension_semantics = [#tpu.dimension_semantics<parallel>, #tpu.dimension_semantics<arbitrary>], iteration_bounds = array<i64: 2, 2>, scalar_prefetch = 0 : i64, scratch_operands = 1 : i64, tpu.core_type = #tpu.core_type<tc>, window_params = [{transform_indices = @transform_0, window_bounds = array<i64: 1, 1, 16>}, {transform_indices = @transform_1, window_bounds = array<i64: 16, 128>}, {transform_indices = @transform_2, window_bounds = array<i64: 1, 128, 384>}, {transform_indices = @transform_3, window_bounds = array<i64: 1, 1, 384>}, {transform_indices = @transform_4, window_bounds = array<i64: 1, 128, 128>}, {transform_indices = @transform_5, window_bounds = array<i64: 1, 1, 128>}, {transform_indices = @transform_6, window_bounds = array<i64: 1, 1, 128>}, {transform_indices = @transform_7, window_bounds = array<i64: 1, 1, 128>}, {transform_indices = @transform_8, window_bounds = array<i64: 1, 128, 256>}, {transform_indices = @transform_9, window_bounds = array<i64: 1, 1, 256>}, {transform_indices = @transform_10, window_bounds = array<i64: 1, 256, 128>}, {transform_indices = @transform_11, window_bounds = array<i64: 1, 1, 128>}, {transform_indices = @transform_12, window_bounds = array<i64: 1, 1, 128>}, {transform_indices = @transform_13, window_bounds = array<i64: 1, 1, 128>}, {pipeline_mode = #tpu.pipeline_mode<synchronous>, transform_indices = @transform_14, window_bounds = array<i64: 128, 128>}, {pipeline_mode = #tpu.pipeline_mode<synchronous>, transform_indices = @transform_15, window_bounds = array<i64: 1, 128>}, {transform_indices = @transform_16, window_bounds = array<i64: 8, 128>}]} {
    %c0_i32 = arith.constant 0 : i32
    %0 = arith.cmpi eq, %arg1, %c0_i32 : i32
    %1 = arith.extui %0 : i1 to i32
    %c0_i32_0 = arith.constant 0 : i32
    %2 = arith.cmpi ne, %1, %c0_i32_0 : i32
    scf.if %2 {
      %c0_85 = arith.constant 0 : index
      %c0_86 = arith.constant 0 : index
      %212 = vector.load %arg3[%c0_85, %c0_86] : memref<16x128xf32, #tpu.memory_space<vmem>>, vector<16x128xf32>
      %c0_87 = arith.constant 0 : index
      %c0_88 = arith.constant 0 : index
      %213 = vector.load %arg19[%c0_87, %c0_88] : memref<16x128xf32, #tpu.memory_space<vmem>>, vector<16x128xf32>
      tpu.vector_store %arg19[%c0_87, %c0_88], %212 {strides = array<i32>} : memref<16x128xf32, #tpu.memory_space<vmem>>, vector<16x128xf32>,
    } else {
    }
    %c0 = arith.constant 0 : index
    %c0_1 = arith.constant 0 : index
    %3 = vector.load %arg19[%c0, %c0_1] : memref<16x128xf32, #tpu.memory_space<vmem>>, vector<16x128xf32>
    %c0_2 = arith.constant 0 : index
    %c0_3 = arith.constant 0 : index
    %c0_4 = arith.constant 0 : index
    %4 = vector.load %arg2[%c0_2, %c0_3, %c0_4] : memref<1x1x16xf32, #tpu.memory_space<vmem>>, vector<1x1x16xf32>
    %5 = vector.shape_cast %4 : vector<1x1x16xf32> to vector<1x16xf32>
    %6 = arith.truncf %3 : vector<16x128xf32> to vector<16x128xbf16>
    %c0_5 = arith.constant 0 : index
    %c0_6 = arith.constant 0 : index
    %c0_7 = arith.constant 0 : index
    %7 = vector.load %arg4[%c0_5, %c0_6, %c0_7] : memref<1x128x384xbf16, #tpu.memory_space<vmem>>, vector<1x128x384xbf16>
    %8 = vector.shape_cast %7 : vector<1x128x384xbf16> to vector<128x384xbf16>
    %cst = arith.constant dense<0.000000e+00> : vector<16x384xf32>
    %9 = tpu.matmul %6, %8, %cst {dimension_numbers = #tpu.dot_dimension_numbers<[1], [0], [0], [1], [0, 0, 1, 1], [], []>} : vector<16x128xbf16>, vector<128x384xbf16>, vector<16x384xf32> -> vector<16x384xf32>
    %c0_8 = arith.constant 0 : index
    %c0_9 = arith.constant 0 : index
    %c0_10 = arith.constant 0 : index
    %10 = vector.load %arg5[%c0_8, %c0_9, %c0_10] : memref<1x1x384xf32, #tpu.memory_space<vmem>>, vector<1x1x384xf32>
    %11 = vector.shape_cast %10 : vector<1x1x384xf32> to vector<1x384xf32>
    %12 = vector.broadcast %11 : vector<1x384xf32> to vector<16x384xf32>
    %13 = arith.addf %9, %12 : vector<16x384xf32>
    %c0_11 = arith.constant 0 : index
    %c0_12 = arith.constant 0 : index
    %c0_13 = arith.constant 0 : index
    %14 = vector.load %arg6[%c0_11, %c0_12, %c0_13] : memref<1x128x128xbf16, #tpu.memory_space<vmem>>, vector<1x128x128xbf16>
    %15 = vector.shape_cast %14 : vector<1x128x128xbf16> to vector<128x128xbf16>
    %cst_14 = arith.constant 0.000000e+00 : f32
    %16 = vector.broadcast %cst_14 : f32 to vector<16x128xf32>
    %17 = vector.extract_strided_slice %13 {offsets = [0, 0], sizes = [16, 32], strides = [1, 1]} : vector<16x384xf32> to vector<16x32xf32>
    %18 = arith.truncf %17 : vector<16x32xf32> to vector<16x32xbf16>
    %19 = vector.extract_strided_slice %13 {offsets = [0, 128], sizes = [16, 32], strides = [1, 1]} : vector<16x384xf32> to vector<16x32xf32>
    %20 = arith.truncf %19 : vector<16x32xf32> to vector<16x32xbf16>
    %21 = vector.extract_strided_slice %13 {offsets = [0, 256], sizes = [16, 32], strides = [1, 1]} : vector<16x384xf32> to vector<16x32xf32>
    %22 = arith.truncf %21 : vector<16x32xf32> to vector<16x32xbf16>
    %cst_15 = arith.constant dense<0.000000e+00> : vector<16x16xf32>
    %23 = tpu.matmul %18, %20, %cst_15 {dimension_numbers = #tpu.dot_dimension_numbers<[1], [1], [0], [0], [0, 0, 1, 0], [], []>} : vector<16x32xbf16>, vector<16x32xbf16>, vector<16x16xf32> -> vector<16x16xf32>
    %cst_16 = arith.constant 0.176776692 : f32
    %24 = vector.broadcast %cst_16 : f32 to vector<16x16xf32>
    %25 = arith.mulf %23, %24 : vector<16x16xf32>
    %26 = vector.broadcast %5 : vector<1x16xf32> to vector<16x16xf32>
    %27 = arith.addf %25, %26 : vector<16x16xf32>
    %cst_17 = arith.constant dense<0xFF800000> : vector<16xf32>
    %28 = vector.multi_reduction <maximumf>, %27, %cst_17 [1] : vector<16x16xf32> to vector<16xf32>
    %29 = vector.shape_cast %28 : vector<16xf32> to vector<16x1xf32>
    %30 = vector.broadcast %29 : vector<16x1xf32> to vector<16x16xf32>
    %31 = arith.subf %27, %30 : vector<16x16xf32>
    %32 = math.exp %31 : vector<16x16xf32>
    %cst_18 = arith.constant dense<0.000000e+00> : vector<16xf32>
    %33 = vector.multi_reduction <add>, %32, %cst_18 [1] : vector<16x16xf32> to vector<16xf32>
    %34 = vector.shape_cast %33 : vector<16xf32> to vector<16x1xf32>
    %35 = tpu.reciprocal %34 {approx = true} : vector<16x1xf32> -> vector<16x1xf32>
    %36 = vector.broadcast %35 : vector<16x1xf32> to vector<16x16xf32>
    %37 = arith.mulf %32, %36 : vector<16x16xf32>
    %38 = arith.truncf %37 : vector<16x16xf32> to vector<16x16xbf16>
    %cst_19 = arith.constant dense<0.000000e+00> : vector<16x32xf32>
    %39 = tpu.matmul %38, %22, %cst_19 {dimension_numbers = #tpu.dot_dimension_numbers<[1], [0], [0], [1], [0, 0, 1, 1], [], []>} : vector<16x16xbf16>, vector<16x32xbf16>, vector<16x32xf32> -> vector<16x32xf32>
    %40 = arith.truncf %39 : vector<16x32xf32> to vector<16x32xbf16>
    %41 = vector.extract_strided_slice %15 {offsets = [0, 0], sizes = [32, 128], strides = [1, 1]} : vector<128x128xbf16> to vector<32x128xbf16>
    %cst_20 = arith.constant dense<0.000000e+00> : vector<16x128xf32>
    %42 = tpu.matmul %40, %41, %cst_20 {dimension_numbers = #tpu.dot_dimension_numbers<[1], [0], [0], [1], [0, 0, 1, 1], [], []>} : vector<16x32xbf16>, vector<32x128xbf16>, vector<16x128xf32> -> vector<16x128xf32>
    %43 = arith.addf %16, %42 : vector<16x128xf32>
    %44 = vector.extract_strided_slice %13 {offsets = [0, 32], sizes = [16, 32], strides = [1, 1]} : vector<16x384xf32> to vector<16x32xf32>
    %45 = arith.truncf %44 : vector<16x32xf32> to vector<16x32xbf16>
    %46 = vector.extract_strided_slice %13 {offsets = [0, 160], sizes = [16, 32], strides = [1, 1]} : vector<16x384xf32> to vector<16x32xf32>
    %47 = arith.truncf %46 : vector<16x32xf32> to vector<16x32xbf16>
    %48 = vector.extract_strided_slice %13 {offsets = [0, 288], sizes = [16, 32], strides = [1, 1]} : vector<16x384xf32> to vector<16x32xf32>
    %49 = arith.truncf %48 : vector<16x32xf32> to vector<16x32xbf16>
    %cst_21 = arith.constant dense<0.000000e+00> : vector<16x16xf32>
    %50 = tpu.matmul %45, %47, %cst_21 {dimension_numbers = #tpu.dot_dimension_numbers<[1], [1], [0], [0], [0, 0, 1, 0], [], []>} : vector<16x32xbf16>, vector<16x32xbf16>, vector<16x16xf32> -> vector<16x16xf32>
    %cst_22 = arith.constant 0.176776692 : f32
    %51 = vector.broadcast %cst_22 : f32 to vector<16x16xf32>
    %52 = arith.mulf %50, %51 : vector<16x16xf32>
    %53 = vector.broadcast %5 : vector<1x16xf32> to vector<16x16xf32>
    %54 = arith.addf %52, %53 : vector<16x16xf32>
    %cst_23 = arith.constant dense<0xFF800000> : vector<16xf32>
    %55 = vector.multi_reduction <maximumf>, %54, %cst_23 [1] : vector<16x16xf32> to vector<16xf32>
    %56 = vector.shape_cast %55 : vector<16xf32> to vector<16x1xf32>
    %57 = vector.broadcast %56 : vector<16x1xf32> to vector<16x16xf32>
    %58 = arith.subf %54, %57 : vector<16x16xf32>
    %59 = math.exp %58 : vector<16x16xf32>
    %cst_24 = arith.constant dense<0.000000e+00> : vector<16xf32>
    %60 = vector.multi_reduction <add>, %59, %cst_24 [1] : vector<16x16xf32> to vector<16xf32>
    %61 = vector.shape_cast %60 : vector<16xf32> to vector<16x1xf32>
    %62 = tpu.reciprocal %61 {approx = true} : vector<16x1xf32> -> vector<16x1xf32>
    %63 = vector.broadcast %62 : vector<16x1xf32> to vector<16x16xf32>
    %64 = arith.mulf %59, %63 : vector<16x16xf32>
    %65 = arith.truncf %64 : vector<16x16xf32> to vector<16x16xbf16>
    %cst_25 = arith.constant dense<0.000000e+00> : vector<16x32xf32>
    %66 = tpu.matmul %65, %49, %cst_25 {dimension_numbers = #tpu.dot_dimension_numbers<[1], [0], [0], [1], [0, 0, 1, 1], [], []>} : vector<16x16xbf16>, vector<16x32xbf16>, vector<16x32xf32> -> vector<16x32xf32>
    %67 = arith.truncf %66 : vector<16x32xf32> to vector<16x32xbf16>
    %68 = vector.extract_strided_slice %15 {offsets = [32, 0], sizes = [32, 128], strides = [1, 1]} : vector<128x128xbf16> to vector<32x128xbf16>
    %cst_26 = arith.constant dense<0.000000e+00> : vector<16x128xf32>
    %69 = tpu.matmul %67, %68, %cst_26 {dimension_numbers = #tpu.dot_dimension_numbers<[1], [0], [0], [1], [0, 0, 1, 1], [], []>} : vector<16x32xbf16>, vector<32x128xbf16>, vector<16x128xf32> -> vector<16x128xf32>
    %70 = arith.addf %43, %69 : vector<16x128xf32>
    %71 = vector.extract_strided_slice %13 {offsets = [0, 64], sizes = [16, 32], strides = [1, 1]} : vector<16x384xf32> to vector<16x32xf32>
    %72 = arith.truncf %71 : vector<16x32xf32> to vector<16x32xbf16>
    %73 = vector.extract_strided_slice %13 {offsets = [0, 192], sizes = [16, 32], strides = [1, 1]} : vector<16x384xf32> to vector<16x32xf32>
    %74 = arith.truncf %73 : vector<16x32xf32> to vector<16x32xbf16>
    %75 = vector.extract_strided_slice %13 {offsets = [0, 320], sizes = [16, 32], strides = [1, 1]} : vector<16x384xf32> to vector<16x32xf32>
    %76 = arith.truncf %75 : vector<16x32xf32> to vector<16x32xbf16>
    %cst_27 = arith.constant dense<0.000000e+00> : vector<16x16xf32>
    %77 = tpu.matmul %72, %74, %cst_27 {dimension_numbers = #tpu.dot_dimension_numbers<[1], [1], [0], [0], [0, 0, 1, 0], [], []>} : vector<16x32xbf16>, vector<16x32xbf16>, vector<16x16xf32> -> vector<16x16xf32>
    %cst_28 = arith.constant 0.176776692 : f32
    %78 = vector.broadcast %cst_28 : f32 to vector<16x16xf32>
    %79 = arith.mulf %77, %78 : vector<16x16xf32>
    %80 = vector.broadcast %5 : vector<1x16xf32> to vector<16x16xf32>
    %81 = arith.addf %79, %80 : vector<16x16xf32>
    %cst_29 = arith.constant dense<0xFF800000> : vector<16xf32>
    %82 = vector.multi_reduction <maximumf>, %81, %cst_29 [1] : vector<16x16xf32> to vector<16xf32>
    %83 = vector.shape_cast %82 : vector<16xf32> to vector<16x1xf32>
    %84 = vector.broadcast %83 : vector<16x1xf32> to vector<16x16xf32>
    %85 = arith.subf %81, %84 : vector<16x16xf32>
    %86 = math.exp %85 : vector<16x16xf32>
    %cst_30 = arith.constant dense<0.000000e+00> : vector<16xf32>
    %87 = vector.multi_reduction <add>, %86, %cst_30 [1] : vector<16x16xf32> to vector<16xf32>
    %88 = vector.shape_cast %87 : vector<16xf32> to vector<16x1xf32>
    %89 = tpu.reciprocal %88 {approx = true} : vector<16x1xf32> -> vector<16x1xf32>
    %90 = vector.broadcast %89 : vector<16x1xf32> to vector<16x16xf32>
    %91 = arith.mulf %86, %90 : vector<16x16xf32>
    %92 = arith.truncf %91 : vector<16x16xf32> to vector<16x16xbf16>
    %cst_31 = arith.constant dense<0.000000e+00> : vector<16x32xf32>
    %93 = tpu.matmul %92, %76, %cst_31 {dimension_numbers = #tpu.dot_dimension_numbers<[1], [0], [0], [1], [0, 0, 1, 1], [], []>} : vector<16x16xbf16>, vector<16x32xbf16>, vector<16x32xf32> -> vector<16x32xf32>
    %94 = arith.truncf %93 : vector<16x32xf32> to vector<16x32xbf16>
    %95 = vector.extract_strided_slice %15 {offsets = [64, 0], sizes = [32, 128], strides = [1, 1]} : vector<128x128xbf16> to vector<32x128xbf16>
    %cst_32 = arith.constant dense<0.000000e+00> : vector<16x128xf32>
    %96 = tpu.matmul %94, %95, %cst_32 {dimension_numbers = #tpu.dot_dimension_numbers<[1], [0], [0], [1], [0, 0, 1, 1], [], []>} : vector<16x32xbf16>, vector<32x128xbf16>, vector<16x128xf32> -> vector<16x128xf32>
    %97 = arith.addf %70, %96 : vector<16x128xf32>
    %98 = vector.extract_strided_slice %13 {offsets = [0, 96], sizes = [16, 32], strides = [1, 1]} : vector<16x384xf32> to vector<16x32xf32>
    %99 = arith.truncf %98 : vector<16x32xf32> to vector<16x32xbf16>
    %100 = vector.extract_strided_slice %13 {offsets = [0, 224], sizes = [16, 32], strides = [1, 1]} : vector<16x384xf32> to vector<16x32xf32>
    %101 = arith.truncf %100 : vector<16x32xf32> to vector<16x32xbf16>
    %102 = vector.extract_strided_slice %13 {offsets = [0, 352], sizes = [16, 32], strides = [1, 1]} : vector<16x384xf32> to vector<16x32xf32>
    %103 = arith.truncf %102 : vector<16x32xf32> to vector<16x32xbf16>
    %cst_33 = arith.constant dense<0.000000e+00> : vector<16x16xf32>
    %104 = tpu.matmul %99, %101, %cst_33 {dimension_numbers = #tpu.dot_dimension_numbers<[1], [1], [0], [0], [0, 0, 1, 0], [], []>} : vector<16x32xbf16>, vector<16x32xbf16>, vector<16x16xf32> -> vector<16x16xf32>
    %cst_34 = arith.constant 0.176776692 : f32
    %105 = vector.broadcast %cst_34 : f32 to vector<16x16xf32>
    %106 = arith.mulf %104, %105 : vector<16x16xf32>
    %107 = vector.broadcast %5 : vector<1x16xf32> to vector<16x16xf32>
    %108 = arith.addf %106, %107 : vector<16x16xf32>
    %cst_35 = arith.constant dense<0xFF800000> : vector<16xf32>
    %109 = vector.multi_reduction <maximumf>, %108, %cst_35 [1] : vector<16x16xf32> to vector<16xf32>
    %110 = vector.shape_cast %109 : vector<16xf32> to vector<16x1xf32>
    %111 = vector.broadcast %110 : vector<16x1xf32> to vector<16x16xf32>
    %112 = arith.subf %108, %111 : vector<16x16xf32>
    %113 = math.exp %112 : vector<16x16xf32>
    %cst_36 = arith.constant dense<0.000000e+00> : vector<16xf32>
    %114 = vector.multi_reduction <add>, %113, %cst_36 [1] : vector<16x16xf32> to vector<16xf32>
    %115 = vector.shape_cast %114 : vector<16xf32> to vector<16x1xf32>
    %116 = tpu.reciprocal %115 {approx = true} : vector<16x1xf32> -> vector<16x1xf32>
    %117 = vector.broadcast %116 : vector<16x1xf32> to vector<16x16xf32>
    %118 = arith.mulf %113, %117 : vector<16x16xf32>
    %119 = arith.truncf %118 : vector<16x16xf32> to vector<16x16xbf16>
    %cst_37 = arith.constant dense<0.000000e+00> : vector<16x32xf32>
    %120 = tpu.matmul %119, %103, %cst_37 {dimension_numbers = #tpu.dot_dimension_numbers<[1], [0], [0], [1], [0, 0, 1, 1], [], []>} : vector<16x16xbf16>, vector<16x32xbf16>, vector<16x32xf32> -> vector<16x32xf32>
    %121 = arith.truncf %120 : vector<16x32xf32> to vector<16x32xbf16>
    %122 = vector.extract_strided_slice %15 {offsets = [96, 0], sizes = [32, 128], strides = [1, 1]} : vector<128x128xbf16> to vector<32x128xbf16>
    %cst_38 = arith.constant dense<0.000000e+00> : vector<16x128xf32>
    %123 = tpu.matmul %121, %122, %cst_38 {dimension_numbers = #tpu.dot_dimension_numbers<[1], [0], [0], [1], [0, 0, 1, 1], [], []>} : vector<16x32xbf16>, vector<32x128xbf16>, vector<16x128xf32> -> vector<16x128xf32>
    %124 = arith.addf %97, %123 : vector<16x128xf32>
    %c0_39 = arith.constant 0 : index
    %c0_40 = arith.constant 0 : index
    %c0_41 = arith.constant 0 : index
    %125 = vector.load %arg7[%c0_39, %c0_40, %c0_41] : memref<1x1x128xf32, #tpu.memory_space<vmem>>, vector<1x1x128xf32>
    %126 = vector.shape_cast %125 : vector<1x1x128xf32> to vector<1x128xf32>
    %127 = vector.broadcast %126 : vector<1x128xf32> to vector<16x128xf32>
    %128 = arith.addf %124, %127 : vector<16x128xf32>
    %129 = arith.addf %3, %128 : vector<16x128xf32>
    %c0_42 = arith.constant 0 : index
    %c0_43 = arith.constant 0 : index
    %c0_44 = arith.constant 0 : index
    %130 = vector.load %arg8[%c0_42, %c0_43, %c0_44] : memref<1x1x128xf32, #tpu.memory_space<vmem>>, vector<1x1x128xf32>
    %131 = vector.shape_cast %130 : vector<1x1x128xf32> to vector<1x128xf32>
    %c0_45 = arith.constant 0 : index
    %c0_46 = arith.constant 0 : index
    %c0_47 = arith.constant 0 : index
    %132 = vector.load %arg9[%c0_45, %c0_46, %c0_47] : memref<1x1x128xf32, #tpu.memory_space<vmem>>, vector<1x1x128xf32>
    %133 = vector.shape_cast %132 : vector<1x1x128xf32> to vector<1x128xf32>
    %cst_48 = arith.constant dense<0.000000e+00> : vector<16xf32>
    %134 = vector.multi_reduction <add>, %129, %cst_48 [1] : vector<16x128xf32> to vector<16xf32>
    %135 = vector.shape_cast %134 : vector<16xf32> to vector<16x1xf32>
    %cst_49 = arith.constant 1.280000e+02 : f32
    %136 = vector.broadcast %cst_49 : f32 to vector<16x1xf32>
    %137 = arith.divf %135, %136 : vector<16x1xf32>
    %138 = vector.broadcast %137 : vector<16x1xf32> to vector<16x128xf32>
    %139 = arith.subf %129, %138 : vector<16x128xf32>
    %140 = arith.mulf %139, %139 : vector<16x128xf32>
    %cst_50 = arith.constant dense<0.000000e+00> : vector<16xf32>
    %141 = vector.multi_reduction <add>, %140, %cst_50 [1] : vector<16x128xf32> to vector<16xf32>
    %142 = vector.shape_cast %141 : vector<16xf32> to vector<16x1xf32>
    %cst_51 = arith.constant 1.280000e+02 : f32
    %143 = vector.broadcast %cst_51 : f32 to vector<16x1xf32>
    %144 = arith.divf %142, %143 : vector<16x1xf32>
    %cst_52 = arith.constant 9.99999996E-13 : f32
    %145 = vector.broadcast %cst_52 : f32 to vector<16x1xf32>
    %146 = arith.addf %144, %145 : vector<16x1xf32>
    %147 = math.rsqrt %146 : vector<16x1xf32>
    %148 = vector.broadcast %147 : vector<16x1xf32> to vector<16x128xf32>
    %149 = arith.mulf %139, %148 : vector<16x128xf32>
    %150 = vector.broadcast %131 : vector<1x128xf32> to vector<16x128xf32>
    %151 = arith.mulf %149, %150 : vector<16x128xf32>
    %152 = vector.broadcast %133 : vector<1x128xf32> to vector<16x128xf32>
    %153 = arith.addf %151, %152 : vector<16x128xf32>
    %154 = arith.truncf %153 : vector<16x128xf32> to vector<16x128xbf16>
    %c0_53 = arith.constant 0 : index
    %c0_54 = arith.constant 0 : index
    %c0_55 = arith.constant 0 : index
    %155 = vector.load %arg10[%c0_53, %c0_54, %c0_55] : memref<1x128x256xbf16, #tpu.memory_space<vmem>>, vector<1x128x256xbf16>
    %156 = vector.shape_cast %155 : vector<1x128x256xbf16> to vector<128x256xbf16>
    %cst_56 = arith.constant dense<0.000000e+00> : vector<16x256xf32>
    %157 = tpu.matmul %154, %156, %cst_56 {dimension_numbers = #tpu.dot_dimension_numbers<[1], [0], [0], [1], [0, 0, 1, 1], [], []>} : vector<16x128xbf16>, vector<128x256xbf16>, vector<16x256xf32> -> vector<16x256xf32>
    %c0_57 = arith.constant 0 : index
    %c0_58 = arith.constant 0 : index
    %c0_59 = arith.constant 0 : index
    %158 = vector.load %arg11[%c0_57, %c0_58, %c0_59] : memref<1x1x256xf32, #tpu.memory_space<vmem>>, vector<1x1x256xf32>
    %159 = vector.shape_cast %158 : vector<1x1x256xf32> to vector<1x256xf32>
    %160 = vector.broadcast %159 : vector<1x256xf32> to vector<16x256xf32>
    %161 = arith.addf %157, %160 : vector<16x256xf32>
    %cst_60 = arith.constant 5.000000e-01 : f32
    %162 = vector.broadcast %cst_60 : f32 to vector<16x256xf32>
    %163 = arith.mulf %162, %161 : vector<16x256xf32>
    %cst_61 = arith.constant 4.471500e-02 : f32
    %164 = vector.broadcast %cst_61 : f32 to vector<16x256xf32>
    %165 = arith.mulf %164, %161 : vector<16x256xf32>
    %166 = arith.mulf %165, %161 : vector<16x256xf32>
    %167 = arith.mulf %166, %161 : vector<16x256xf32>
    %168 = arith.addf %161, %167 : vector<16x256xf32>
    %cst_62 = arith.constant 0.797884583 : f32
    %169 = vector.broadcast %cst_62 : f32 to vector<16x256xf32>
    %170 = arith.mulf %169, %168 : vector<16x256xf32>
    %171 = math.tanh %170 : vector<16x256xf32>
    %cst_63 = arith.constant 1.000000e+00 : f32
    %172 = vector.broadcast %cst_63 : f32 to vector<16x256xf32>
    %173 = arith.addf %172, %171 : vector<16x256xf32>
    %174 = arith.mulf %163, %173 : vector<16x256xf32>
    %175 = arith.truncf %174 : vector<16x256xf32> to vector<16x256xbf16>
    %c0_64 = arith.constant 0 : index
    %c0_65 = arith.constant 0 : index
    %c0_66 = arith.constant 0 : index
    %176 = vector.load %arg12[%c0_64, %c0_65, %c0_66] : memref<1x256x128xbf16, #tpu.memory_space<vmem>>, vector<1x256x128xbf16>
    %177 = vector.shape_cast %176 : vector<1x256x128xbf16> to vector<256x128xbf16>
    %cst_67 = arith.constant dense<0.000000e+00> : vector<16x128xf32>
    %178 = tpu.matmul %175, %177, %cst_67 {dimension_numbers = #tpu.dot_dimension_numbers<[1], [0], [0], [1], [0, 0, 1, 1], [], []>} : vector<16x256xbf16>, vector<256x128xbf16>, vector<16x128xf32> -> vector<16x128xf32>
    %c0_68 = arith.constant 0 : index
    %c0_69 = arith.constant 0 : index
    %c0_70 = arith.constant 0 : index
    %179 = vector.load %arg13[%c0_68, %c0_69, %c0_70] : memref<1x1x128xf32, #tpu.memory_space<vmem>>, vector<1x1x128xf32>
    %180 = vector.shape_cast %179 : vector<1x1x128xf32> to vector<1x128xf32>
    %181 = vector.broadcast %180 : vector<1x128xf32> to vector<16x128xf32>
    %182 = arith.addf %178, %181 : vector<16x128xf32>
    %183 = arith.addf %153, %182 : vector<16x128xf32>
    %c0_71 = arith.constant 0 : index
    %c0_72 = arith.constant 0 : index
    %c0_73 = arith.constant 0 : index
    %184 = vector.load %arg14[%c0_71, %c0_72, %c0_73] : memref<1x1x128xf32, #tpu.memory_space<vmem>>, vector<1x1x128xf32>
    %185 = vector.shape_cast %184 : vector<1x1x128xf32> to vector<1x128xf32>
    %c0_74 = arith.constant 0 : index
    %c0_75 = arith.constant 0 : index
    %c0_76 = arith.constant 0 : index
    %186 = vector.load %arg15[%c0_74, %c0_75, %c0_76] : memref<1x1x128xf32, #tpu.memory_space<vmem>>, vector<1x1x128xf32>
    %187 = vector.shape_cast %186 : vector<1x1x128xf32> to vector<1x128xf32>
    %cst_77 = arith.constant dense<0.000000e+00> : vector<16xf32>
    %188 = vector.multi_reduction <add>, %183, %cst_77 [1] : vector<16x128xf32> to vector<16xf32>
    %189 = vector.shape_cast %188 : vector<16xf32> to vector<16x1xf32>
    %cst_78 = arith.constant 1.280000e+02 : f32
    %190 = vector.broadcast %cst_78 : f32 to vector<16x1xf32>
    %191 = arith.divf %189, %190 : vector<16x1xf32>
    %192 = vector.broadcast %191 : vector<16x1xf32> to vector<16x128xf32>
    %193 = arith.subf %183, %192 : vector<16x128xf32>
    %194 = arith.mulf %193, %193 : vector<16x128xf32>
    %cst_79 = arith.constant dense<0.000000e+00> : vector<16xf32>
    %195 = vector.multi_reduction <add>, %194, %cst_79 [1] : vector<16x128xf32> to vector<16xf32>
    %196 = vector.shape_cast %195 : vector<16xf32> to vector<16x1xf32>
    %cst_80 = arith.constant 1.280000e+02 : f32
    %197 = vector.broadcast %cst_80 : f32 to vector<16x1xf32>
    %198 = arith.divf %196, %197 : vector<16x1xf32>
    %cst_81 = arith.constant 9.99999996E-13 : f32
    %199 = vector.broadcast %cst_81 : f32 to vector<16x1xf32>
    %200 = arith.addf %198, %199 : vector<16x1xf32>
    %201 = math.rsqrt %200 : vector<16x1xf32>
    %202 = vector.broadcast %201 : vector<16x1xf32> to vector<16x128xf32>
    %203 = arith.mulf %193, %202 : vector<16x128xf32>
    %204 = vector.broadcast %185 : vector<1x128xf32> to vector<16x128xf32>
    %205 = arith.mulf %203, %204 : vector<16x128xf32>
    %206 = vector.broadcast %187 : vector<1x128xf32> to vector<16x128xf32>
    %207 = arith.addf %205, %206 : vector<16x128xf32>
    %c0_82 = arith.constant 0 : index
    %c0_83 = arith.constant 0 : index
    %208 = vector.load %arg19[%c0_82, %c0_83] : memref<16x128xf32, #tpu.memory_space<vmem>>, vector<16x128xf32>
    tpu.vector_store %arg19[%c0_82, %c0_83], %207 {strides = array<i32>} : memref<16x128xf32, #tpu.memory_space<vmem>>, vector<16x128xf32>,
    %c1_i32 = arith.constant 1 : i32
    %209 = arith.cmpi eq, %arg1, %c1_i32 : i32
    %210 = arith.extui %209 : i1 to i32
    %c0_i32_84 = arith.constant 0 : i32
    %211 = arith.cmpi ne, %210, %c0_i32_84 : i32
    scf.if %211 {
      %212 = vector.extract_strided_slice %207 {offsets = [0, 0], sizes = [8, 128], strides = [1, 1]} : vector<16x128xf32> to vector<8x128xf32>
      %213 = arith.truncf %212 : vector<8x128xf32> to vector<8x128xbf16>
      %c0_85 = arith.constant 0 : index
      %c0_86 = arith.constant 0 : index
      %214 = vector.load %arg16[%c0_85, %c0_86] : memref<128x128xbf16, #tpu.memory_space<vmem>>, vector<128x128xbf16>
      %cst_87 = arith.constant dense<0.000000e+00> : vector<8x128xf32>
      %215 = tpu.matmul %213, %214, %cst_87 {dimension_numbers = #tpu.dot_dimension_numbers<[1], [0], [0], [1], [0, 0, 1, 1], [], []>} : vector<8x128xbf16>, vector<128x128xbf16>, vector<8x128xf32> -> vector<8x128xf32>
      %c0_88 = arith.constant 0 : index
      %c0_89 = arith.constant 0 : index
      %216 = vector.load %arg17[%c0_88, %c0_89] : memref<1x128xf32, #tpu.memory_space<vmem>>, vector<1x128xf32>
      %217 = vector.broadcast %216 : vector<1x128xf32> to vector<8x128xf32>
      %218 = arith.addf %215, %217 : vector<8x128xf32>
      %c0_90 = arith.constant 0 : index
      %c0_91 = arith.constant 0 : index
      %219 = vector.load %arg18[%c0_90, %c0_91] : memref<8x128xf32, #tpu.memory_space<vmem>>, vector<8x128xf32>
      tpu.vector_store %arg18[%c0_90, %c0_91], %218 {strides = array<i32>} : memref<8x128xf32, #tpu.memory_space<vmem>>, vector<8x128xf32>,
    } else {
    }
    return
  }
  func.func @transform_0(%arg0: i32, %arg1: i32) -> (i32, i32, i32) {
    %c0_i32 = arith.constant 0 : i32
    %c0_i32_0 = arith.constant 0 : i32
    %c0_i32_1 = arith.constant 0 : i32
    return %arg0, %c0_i32, %c0_i32_0 : i32, i32, i32
  }
  func.func @transform_1(%arg0: i32, %arg1: i32) -> (i32, i32) {
    %c0_i32 = arith.constant 0 : i32
    %c0_i32_0 = arith.constant 0 : i32
    return %arg0, %c0_i32 : i32, i32
  }
  func.func @transform_2(%arg0: i32, %arg1: i32) -> (i32, i32, i32) {
    %c0_i32 = arith.constant 0 : i32
    %c0_i32_0 = arith.constant 0 : i32
    %c0_i32_1 = arith.constant 0 : i32
    return %arg1, %c0_i32, %c0_i32_0 : i32, i32, i32
  }
  func.func @transform_3(%arg0: i32, %arg1: i32) -> (i32, i32, i32) {
    %c0_i32 = arith.constant 0 : i32
    %c0_i32_0 = arith.constant 0 : i32
    %c0_i32_1 = arith.constant 0 : i32
    return %arg1, %c0_i32, %c0_i32_0 : i32, i32, i32
  }
  func.func @transform_4(%arg0: i32, %arg1: i32) -> (i32, i32, i32) {
    %c0_i32 = arith.constant 0 : i32
    %c0_i32_0 = arith.constant 0 : i32
    %c0_i32_1 = arith.constant 0 : i32
    return %arg1, %c0_i32, %c0_i32_0 : i32, i32, i32
  }
  func.func @transform_5(%arg0: i32, %arg1: i32) -> (i32, i32, i32) {
    %c0_i32 = arith.constant 0 : i32
    %c0_i32_0 = arith.constant 0 : i32
    %c0_i32_1 = arith.constant 0 : i32
    return %arg1, %c0_i32, %c0_i32_0 : i32, i32, i32
  }
  func.func @transform_6(%arg0: i32, %arg1: i32) -> (i32, i32, i32) {
    %c0_i32 = arith.constant 0 : i32
    %c0_i32_0 = arith.constant 0 : i32
    %c0_i32_1 = arith.constant 0 : i32
    return %arg1, %c0_i32, %c0_i32_0 : i32, i32, i32
  }
  func.func @transform_7(%arg0: i32, %arg1: i32) -> (i32, i32, i32) {
    %c0_i32 = arith.constant 0 : i32
    %c0_i32_0 = arith.constant 0 : i32
    %c0_i32_1 = arith.constant 0 : i32
    return %arg1, %c0_i32, %c0_i32_0 : i32, i32, i32
  }
  func.func @transform_8(%arg0: i32, %arg1: i32) -> (i32, i32, i32) {
    %c0_i32 = arith.constant 0 : i32
    %c0_i32_0 = arith.constant 0 : i32
    %c0_i32_1 = arith.constant 0 : i32
    return %arg1, %c0_i32, %c0_i32_0 : i32, i32, i32
  }
  func.func @transform_9(%arg0: i32, %arg1: i32) -> (i32, i32, i32) {
    %c0_i32 = arith.constant 0 : i32
    %c0_i32_0 = arith.constant 0 : i32
    %c0_i32_1 = arith.constant 0 : i32
    return %arg1, %c0_i32, %c0_i32_0 : i32, i32, i32
  }
  func.func @transform_10(%arg0: i32, %arg1: i32) -> (i32, i32, i32) {
    %c0_i32 = arith.constant 0 : i32
    %c0_i32_0 = arith.constant 0 : i32
    %c0_i32_1 = arith.constant 0 : i32
    return %arg1, %c0_i32, %c0_i32_0 : i32, i32, i32
  }
  func.func @transform_11(%arg0: i32, %arg1: i32) -> (i32, i32, i32) {
    %c0_i32 = arith.constant 0 : i32
    %c0_i32_0 = arith.constant 0 : i32
    %c0_i32_1 = arith.constant 0 : i32
    return %arg1, %c0_i32, %c0_i32_0 : i32, i32, i32
  }
  func.func @transform_12(%arg0: i32, %arg1: i32) -> (i32, i32, i32) {
    %c0_i32 = arith.constant 0 : i32
    %c0_i32_0 = arith.constant 0 : i32
    %c0_i32_1 = arith.constant 0 : i32
    return %arg1, %c0_i32, %c0_i32_0 : i32, i32, i32
  }
  func.func @transform_13(%arg0: i32, %arg1: i32) -> (i32, i32, i32) {
    %c0_i32 = arith.constant 0 : i32
    %c0_i32_0 = arith.constant 0 : i32
    %c0_i32_1 = arith.constant 0 : i32
    return %arg1, %c0_i32, %c0_i32_0 : i32, i32, i32
  }
  func.func @transform_14(%arg0: i32, %arg1: i32) -> (i32, i32) {
    %c0_i32 = arith.constant 0 : i32
    %c0_i32_0 = arith.constant 0 : i32
    %c0_i32_1 = arith.constant 0 : i32
    return %c0_i32, %c0_i32_0 : i32, i32
  }
  func.func @transform_15(%arg0: i32, %arg1: i32) -> (i32, i32) {
    %c0_i32 = arith.constant 0 : i32
    %c0_i32_0 = arith.constant 0 : i32
    %c0_i32_1 = arith.constant 0 : i32
    return %c0_i32, %c0_i32_0 : i32, i32
  }
  func.func @transform_16(%arg0: i32, %arg1: i32) -> (i32, i32) {
    %c0_i32 = arith.constant 0 : i32
    %c0_i32_0 = arith.constant 0 : i32
    return %arg0, %c0_i32 : i32, i32
  }
}

</mosaic_0001>

<llo_original>
// kernel: life_advisor_forward.1
$region0: #{life_advisor_forward.1}
  #allocation0 [shape = 'u32[]', space=smem, size = 0x4, offset = 0x4, fixed_abs, tag = 'smem constant byte address 0x4 - core index']
  #allocation1 [shape = 'u32[144,128]{1,0:T(1,128)}', space=vmem, size = 0x12000, scoped, tag = 'internal scratch']
  #allocation2 [shape = 'f32[16,128]{1,0:T(8,128)}', space=vmem, size = 0x2000, scoped, tag = 'scratch operand']
  %s0 = inlined_call_operand.vmem [shape: f32[2,1,16], index: 0, kind: input, shape index: {}]
  %s1 = inlined_call_operand.vmem [shape: f32[32,128], index: 1, kind: input, shape index: {}]
  %s2 = inlined_call_operand.vmem [shape: bf16[2,128,384], index: 2, kind: input, shape index: {}]
  %s3 = inlined_call_operand.hbm [shape: f32[2,1,384], index: 3, kind: input, shape index: {}]
  %s4 = inlined_call_operand.vmem [shape: bf16[2,128,128], index: 4, kind: input, shape index: {}]
  %s5 = inlined_call_operand.hbm [shape: f32[2,1,128], index: 5, kind: input, shape index: {}]
  %s6 = inlined_call_operand.hbm [shape: f32[2,1,128], index: 6, kind: input, shape index: {}]
  %s7 = inlined_call_operand.hbm [shape: f32[2,1,128], index: 7, kind: input, shape index: {}]
  %s8 = inlined_call_operand.hbm [shape: bf16[2,128,256], index: 8, kind: input, shape index: {}]
  %s9 = inlined_call_operand.vmem [shape: f32[2,1,256], index: 9, kind: input, shape index: {}]
  %s10 = inlined_call_operand.hbm [shape: bf16[2,256,128], index: 10, kind: input, shape index: {}]
  %s11 = inlined_call_operand.vmem [shape: f32[2,1,128], index: 11, kind: input, shape index: {}]
  %s12 = inlined_call_operand.hbm [shape: f32[2,1,128], index: 12, kind: input, shape index: {}]
  %s13 = inlined_call_operand.hbm [shape: f32[2,1,128], index: 13, kind: input, shape index: {}]
  %s14 = inlined_call_operand.vmem [shape: bf16[128,128], index: 14, kind: input, shape index: {}]
  %s15 = inlined_call_operand.vmem [shape: f32[1,128], index: 15, kind: input, shape index: {}]
  %s16 = inlined_call_operand.vmem [shape: f32[16,128], index: 16, kind: output, shape index: {}]
  %s17 = sld [smem:[#allocation0]]
  $region137: #{life_advisor_forward.1} parent=0
    _
  %s19 = ssub.s32 1, %s17
  %s20 = scalar_select 0, %s19, %s17
  $region1: #{life_advisor_forward.1} parent=0
    #allocation3 [shape = 'u8[3072]{0}', space=vmem, size = 0xc00, scoped, tag = 'input window, operand 3']
    #allocation4 [shape = 's32[2]{0}', space=sflag, size = 0x8, scoped, tag = 'scoped memory for life_advisor_forward.1']
    #allocation5 [shape = 'u8[1024]{0}', space=vmem, size = 0x400, scoped, tag = 'input window, operand 5']
    #allocation6 [shape = 's32[2]{0}', space=sflag, size = 0x8, scoped, tag = 'scoped memory for life_advisor_forward.1']
    #allocation7 [shape = 'u8[1024]{0}', space=vmem, size = 0x400, scoped, tag = 'input window, operand 6']
    #allocation8 [shape = 'u8[1024]{0}', space=vmem, size = 0x400, scoped, tag = 'input window, operand 7']
    #allocation9 [shape = 's32[2]{0}', space=sflag, size = 0x8, scoped, tag = 'scoped memory for life_advisor_forward.1']
    #allocation10 [shape = 'u8[131072]{0}', space=vmem, size = 0x20000, scoped, tag = 'input window, operand 8']
    #allocation11 [shape = 'u8[131072]{0}', space=vmem, size = 0x20000, scoped, tag = 'input window, operand 10']
    #allocation12 [shape = 's32[2]{0}', space=sflag, size = 0x8, scoped, tag = 'scoped memory for life_advisor_forward.1']
    #allocation13 [shape = 'u8[1024]{0}', space=vmem, size = 0x400, scoped, tag = 'input window, operand 12']
    #allocation14 [shape = 'u8[1024]{0}', space=vmem, size = 0x400, scoped, tag = 'input window, operand 13']
    #allocation15 [shape = 's32[2]{0}', space=sflag, size = 0x8, scoped, tag = 'scoped memory for life_advisor_forward.1']
    %21 = vsyncpa [#allocation4], 0
    %s22 = scalar_lea.sflag [#allocation4], 1
    %23 = vsyncpa %s22, 0
    %24 = vsyncpa [#allocation6], 0
    %s25 = scalar_lea.sflag [#allocation6], 1
    %26 = vsyncpa %s25, 0
    %27 = vsyncpa [#allocation9], 0
    %s28 = scalar_lea.sflag [#allocation9], 1
    %29 = vsyncpa %s28, 0
    %30 = vsyncpa [#allocation12], 0
    %s31 = scalar_lea.sflag [#allocation12], 1
    %32 = vsyncpa %s31, 0
    %33 = vsyncpa [#allocation15], 0
    %s34 = scalar_lea.sflag [#allocation15], 1
    %35 = vsyncpa %s34, 0
    loop: start=0, step=1, limit=6
    $region2: #{life_advisor_forward.1} parent=1 // loop_pre_header
      _
    $region3: #{life_advisor_forward.1} parent=1 // loop_header
      %s37 = sphi 0, %s41
      %p38 = scmp.ge.s32.totalorder %s37, 6
      %s44 = sphi 0, %s56
      %s45 = sphi 0, %s52
      %s46 = sphi 0, %s44
      %s47 = sphi 0, %s45
      %s48 = sphi 0, %s46
      %s49 = sphi 0, %s47
      %s59 = sphi 0, %s61
      %s62 = sphi 0, %s59
      %s63 = sphi 0, %s62
      %s79 = sphi 0, %s63
      %s85 = sphi 0, %s87
      %s88 = sphi 0, %s85
      %s89 = sphi 0, %s88
      %s105 = sphi 0, %s89
      %s111 = sphi 0, %s113
      %s114 = sphi 0, %s111
      %s115 = sphi 0, %s114
      %s131 = sphi 0, %s115
      %s137 = sphi 0, %s139
      %s140 = sphi 0, %s137
      %s141 = sphi 0, %s140
      %s157 = sphi 0, %s141
      %s163 = sphi 0, %s165
      %s166 = sphi 0, %s163
      %s167 = sphi 0, %s166
      %s183 = sphi 0, %s167
      %s189 = sphi 0, %s191
      %s192 = sphi 0, %s189
      %s193 = sphi 0, %s192
      %s209 = sphi 0, %s193
      %s215 = sphi 0, %s217
      %s218 = sphi 0, %s215
      %s219 = sphi 0, %s218
      %s235 = sphi 0, %s219
      %s241 = sphi 0, %s243
      %s244 = sphi 0, %s241
      %s245 = sphi 0, %s244
      %s261 = sphi 0, %s245
      %s267 = sphi 0, %s269
      %s270 = sphi 0, %s267
      %s271 = sphi 0, %s270
      %s287 = sphi 0, %s271
      %s293 = sphi 0, %s295
      %s296 = sphi 0, %s293
      %s297 = sphi 0, %s296
      %s313 = sphi 0, %s297
      %s319 = sphi 0, %s321
      %s322 = sphi 0, %s319
      %s323 = sphi 0, %s322
      %s339 = sphi 0, %s323
      %s345 = sphi 0, %s347
      %s348 = sphi 0, %s345
      %s349 = sphi 0, %s348
      %s365 = sphi 0, %s349
      %s371 = sphi 0, %s373
      %s374 = sphi 0, %s371
      %s375 = sphi 0, %s374
      %s391 = sphi 0, %s375
      %s397 = sphi 0, %s399
      %s400 = sphi 0, %s397
      %s401 = sphi 0, %s400
      %s417 = sphi 0, %s401
      %s421 = sphi 0, %s421
      %s423 = sphi 0, %s421
      %s424 = sphi 0, %s423
      %s438 = sphi 0, %s424
      %s442 = sphi 0, %s442
      %s444 = sphi 0, %s442
      %s445 = sphi 0, %s444
      %s459 = sphi 0, %s445
      %s465 = sphi 0, %s467
      %s468 = sphi 0, %s465
      %s469 = sphi 0, %s468
      %s485 = sphi 0, %s469
    $region4: #{life_advisor_forward.1} parent=1 // loop_header_branch
      %40 = sbr.rel (%p38) target = $region8
    $region5: #{life_advisor_forward.1} parent=1 // loop_body
      %s42 = ssub.s32 %s37, 1
      %s43 = ssub.s32 %s37, 2
      %s50 = sadd.s32 1, %s45
      %p51 = scmp.ge.s32.totalorder %s50, 2
      %s52 = scalar_select %p51, 0, %s50
      %s53 = sadd.s32 1, %s44
      %s54 = scalar_select %p51, %s53, %s44
      %p55 = scmp.ge.s32.totalorder %s54, 2
      %s56 = scalar_select %p55, 0, %s54
      %s57 = ssub.s32 %s44, %s56
      %p58 = scmp.eq.s32.totalorder %s57, 0
      %s60 = sadd.s32 %s59, 1
      %s61 = scalar_select %p58, %s59, %s60
      %p64 = pneg %p58
      %p65 = scmp.eq.s32.totalorder %s37, 3
      %p66 = por %p64, %p65
      %p67 = scmp.ne.s32.totalorder %s59, %s62
      %p68 = scmp.eq.s32.totalorder %s37, 0
      %p69 = por %p67, %p68
      %p70 = scmp.ne.s32.totalorder %s59, %s62
      %p71 = scmp.eq.s32.totalorder %s42, 3
      %p72 = por %p70, %p71
      %p73 = scmp.ne.s32.totalorder %s62, %s63
      %p74 = scmp.eq.s32.totalorder %s42, 0
      %p75 = por %p73, %p74
      %p76 = scmp.ne.s32.totalorder %s62, %s63
      %p77 = scmp.eq.s32.totalorder %s43, 3
      %p78 = por %p76, %p77
      %p80 = scmp.ne.s32.totalorder %s63, %s79
      %p81 = scmp.eq.s32.totalorder %s43, 0
      %p82 = por %p80, %p81
      %s83 = ssub.s32 %s44, %s56
      %p84 = scmp.eq.s32.totalorder %s83, 0
      %s86 = sadd.s32 %s85, 1
      %s87 = scalar_select %p84, %s85, %s86
      %p90 = pneg %p84
      %p91 = scmp.eq.s32.totalorder %s37, 3
      %p92 = por %p90, %p91
      %p93 = scmp.ne.s32.totalorder %s85, %s88
      %p94 = scmp.eq.s32.totalorder %s37, 0
      %p95 = por %p93, %p94
      %p96 = scmp.ne.s32.totalorder %s85, %s88
      %p97 = scmp.eq.s32.totalorder %s42, 3
      %p98 = por %p96, %p97
      %p99 = scmp.ne.s32.totalorder %s88, %s89
      %p100 = scmp.eq.s32.totalorder %s42, 0
      %p101 = por %p99, %p100
      %p102 = scmp.ne.s32.totalorder %s88, %s89
      %p103 = scmp.eq.s32.totalorder %s43, 3
      %p104 = por %p102, %p103
      %p106 = scmp.ne.s32.totalorder %s89, %s105
      %p107 = scmp.eq.s32.totalorder %s43, 0
      %p108 = por %p106, %p107
      %s109 = ssub.s32 %s45, %s52
      %p110 = scmp.eq.s32.totalorder %s109, 0
      %s112 = sadd.s32 %s111, 1
      %s113 = scalar_select %p110, %s111, %s112
      %p116 = pneg %p110
      %p117 = scmp.eq.s32.totalorder %s37, 3
      %p118 = por %p116, %p117
      %p119 = scmp.ne.s32.totalorder %s111, %s114
      %p120 = scmp.eq.s32.totalorder %s37, 0
      %p121 = por %p119, %p120
      %p122 = scmp.ne.s32.totalorder %s111, %s114
      %p123 = scmp.eq.s32.totalorder %s42, 3
      %p124 = por %p122, %p123
      %p125 = scmp.ne.s32.totalorder %s114, %s115
      %p126 = scmp.eq.s32.totalorder %s42, 0
      %p127 = por %p125, %p126
      %p128 = scmp.ne.s32.totalorder %s114, %s115
      %p129 = scmp.eq.s32.totalorder %s43, 3
      %p130 = por %p128, %p129
      %p132 = scmp.ne.s32.totalorder %s115, %s131
      %p133 = scmp.eq.s32.totalorder %s43, 0
      %p134 = por %p132, %p133
      %s135 = ssub.s32 %s45, %s52
      %p136 = scmp.eq.s32.totalorder %s135, 0
      %s138 = sadd.s32 %s137, 1
      %s139 = scalar_select %p136, %s137, %s138
      %p142 = pneg %p136
      %p143 = scmp.eq.s32.totalorder %s37, 3
      %p144 = por %p142, %p143
      %p145 = scmp.ne.s32.totalorder %s137, %s140
      %p146 = scmp.eq.s32.totalorder %s37, 0
      %p147 = por %p145, %p146
      %p148 = scmp.ne.s32.totalorder %s137, %s140
      %p149 = scmp.eq.s32.totalorder %s42, 3
      %p150 = por %p148, %p149
      %p151 = scmp.ne.s32.totalorder %s140, %s141
      %p152 = scmp.eq.s32.totalorder %s42, 0
      %p153 = por %p151, %p152
      %p154 = scmp.ne.s32.totalorder %s140, %s141
      %p155 = scmp.eq.s32.totalorder %s43, 3
      %p156 = por %p154, %p155
      %p158 = scmp.ne.s32.totalorder %s141, %s157
      %p159 = scmp.eq.s32.totalorder %s43, 0
      %p160 = por %p158, %p159
      %s161 = ssub.s32 %s45, %s52
      %p162 = scmp.eq.s32.totalorder %s161, 0
      %s164 = sadd.s32 %s163, 1
      %s165 = scalar_select %p162, %s163, %s164
      %p168 = pneg %p162
      %p169 = scmp.eq.s32.totalorder %s37, 3
      %p170 = por %p168, %p169
      %p171 = scmp.ne.s32.totalorder %s163, %s166
      %p172 = scmp.eq.s32.totalorder %s37, 0
      %p173 = por %p171, %p172
      %p174 = scmp.ne.s32.totalorder %s163, %s166
      %p175 = scmp.eq.s32.totalorder %s42, 3
      %p176 = por %p174, %p175
      %p177 = scmp.ne.s32.totalorder %s166, %s167
      %p178 = scmp.eq.s32.totalorder %s42, 0
      %p179 = por %p177, %p178
      %p180 = scmp.ne.s32.totalorder %s166, %s167
      %p181 = scmp.eq.s32.totalorder %s43, 3
      %p182 = por %p180, %p181
      %p184 = scmp.ne.s32.totalorder %s167, %s183
      %p185 = scmp.eq.s32.totalorder %s43, 0
      %p186 = por %p184, %p185
      %s187 = ssub.s32 %s45, %s52
      %p188 = scmp.eq.s32.totalorder %s187, 0
      %s190 = sadd.s32 %s189, 1
      %s191 = scalar_select %p188, %s189, %s190
      %p194 = pneg %p188
      %p195 = scmp.eq.s32.totalorder %s37, 3
      %p196 = por %p194, %p195
      %p197 = scmp.ne.s32.totalorder %s189, %s192
      %p198 = scmp.eq.s32.totalorder %s37, 0
      %p199 = por %p197, %p198
      %p200 = scmp.ne.s32.totalorder %s189, %s192
      %p201 = scmp.eq.s32.totalorder %s42, 3
      %p202 = por %p200, %p201
      %p203 = scmp.ne.s32.totalorder %s192, %s193
      %p204 = scmp.eq.s32.totalorder %s42, 0
      %p205 = por %p203, %p204
      %p206 = scmp.ne.s32.totalorder %s192, %s193
      %p207 = scmp.eq.s32.totalorder %s43, 3
      %p208 = por %p206, %p207
      %p210 = scmp.ne.s32.totalorder %s193, %s209
      %p211 = scmp.eq.s32.totalorder %s43, 0
      %p212 = por %p210, %p211
      %s213 = ssub.s32 %s45, %s52
      %p214 = scmp.eq.s32.totalorder %s213, 0
      %s216 = sadd.s32 %s215, 1
      %s217 = scalar_select %p214, %s215, %s216
      %p220 = pneg %p214
      %p221 = scmp.eq.s32.totalorder %s37, 3
      %p222 = por %p220, %p221
      %p223 = scmp.ne.s32.totalorder %s215, %s218
      %p224 = scmp.eq.s32.totalorder %s37, 0
      %p225 = por %p223, %p224
      %p226 = scmp.ne.s32.totalorder %s215, %s218
      %p227 = scmp.eq.s32.totalorder %s42, 3
      %p228 = por %p226, %p227
      %p229 = scmp.ne.s32.totalorder %s218, %s219
      %p230 = scmp.eq.s32.totalorder %s42, 0
      %p231 = por %p229, %p230
      %p232 = scmp.ne.s32.totalorder %s218, %s219
      %p233 = scmp.eq.s32.totalorder %s43, 3
      %p234 = por %p232, %p233
      %p236 = scmp.ne.s32.totalorder %s219, %s235
      %p237 = scmp.eq.s32.totalorder %s43, 0
      %p238 = por %p236, %p237
      %s239 = ssub.s32 %s45, %s52
      %p240 = scmp.eq.s32.totalorder %s239, 0
      %s242 = sadd.s32 %s241, 1
      %s243 = scalar_select %p240, %s241, %s242
      %p246 = pneg %p240
      %p247 = scmp.eq.s32.totalorder %s37, 3
      %p248 = por %p246, %p247
      %p249 = scmp.ne.s32.totalorder %s241, %s244
      %p250 = scmp.eq.s32.totalorder %s37, 0
      %p251 = por %p249, %p250
      %p252 = scmp.ne.s32.totalorder %s241, %s244
      %p253 = scmp.eq.s32.totalorder %s42, 3
      %p254 = por %p252, %p253
      %p255 = scmp.ne.s32.totalorder %s244, %s245
      %p256 = scmp.eq.s32.totalorder %s42, 0
      %p257 = por %p255, %p256
      %p258 = scmp.ne.s32.totalorder %s244, %s245
      %p259 = scmp.eq.s32.totalorder %s43, 3
      %p260 = por %p258, %p259
      %p262 = scmp.ne.s32.totalorder %s245, %s261
      %p263 = scmp.eq.s32.totalorder %s43, 0
      %p264 = por %p262, %p263
      %s265 = ssub.s32 %s45, %s52
      %p266 = scmp.eq.s32.totalorder %s265, 0
      %s268 = sadd.s32 %s267, 1
      %s269 = scalar_select %p266, %s267, %s268
      %p272 = pneg %p266
      %p273 = scmp.eq.s32.totalorder %s37, 3
      %p274 = por %p272, %p273
      %p275 = scmp.ne.s32.totalorder %s267, %s270
      %p276 = scmp.eq.s32.totalorder %s37, 0
      %p277 = por %p275, %p276
      %p278 = scmp.ne.s32.totalorder %s267, %s270
      %p279 = scmp.eq.s32.totalorder %s42, 3
      %p280 = por %p278, %p279
      %p281 = scmp.ne.s32.totalorder %s270, %s271
      %p282 = scmp.eq.s32.totalorder %s42, 0
      %p283 = por %p281, %p282
      %p284 = scmp.ne.s32.totalorder %s270, %s271
      %p285 = scmp.eq.s32.totalorder %s43, 3
      %p286 = por %p284, %p285
      %p288 = scmp.ne.s32.totalorder %s271, %s287
      %p289 = scmp.eq.s32.totalorder %s43, 0
      %p290 = por %p288, %p289
      %s291 = ssub.s32 %s45, %s52
      %p292 = scmp.eq.s32.totalorder %s291, 0
      %s294 = sadd.s32 %s293, 1
      %s295 = scalar_select %p292, %s293, %s294
      %p298 = pneg %p292
      %p299 = scmp.eq.s32.totalorder %s37, 3
      %p300 = por %p298, %p299
      %p301 = scmp.ne.s32.totalorder %s293, %s296
      %p302 = scmp.eq.s32.totalorder %s37, 0
      %p303 = por %p301, %p302
      %p304 = scmp.ne.s32.totalorder %s293, %s296
      %p305 = scmp.eq.s32.totalorder %s42, 3
      %p306 = por %p304, %p305
      %p307 = scmp.ne.s32.totalorder %s296, %s297
      %p308 = scmp.eq.s32.totalorder %s42, 0
      %p309 = por %p307, %p308
      %p310 = scmp.ne.s32.totalorder %s296, %s297
      %p311 = scmp.eq.s32.totalorder %s43, 3
      %p312 = por %p310, %p311
      %p314 = scmp.ne.s32.totalorder %s297, %s313
      %p315 = scmp.eq.s32.totalorder %s43, 0
      %p316 = por %p314, %p315
      %s317 = ssub.s32 %s45, %s52
      %p318 = scmp.eq.s32.totalorder %s317, 0
      %s320 = sadd.s32 %s319, 1
      %s321 = scalar_select %p318, %s319, %s320
      %p324 = pneg %p318
      %p325 = scmp.eq.s32.totalorder %s37, 3
      %p326 = por %p324, %p325
      %p327 = scmp.ne.s32.totalorder %s319, %s322
      %p328 = scmp.eq.s32.totalorder %s37, 0
      %p329 = por %p327, %p328
      %p330 = scmp.ne.s32.totalorder %s319, %s322
      %p331 = scmp.eq.s32.totalorder %s42, 3
      %p332 = por %p330, %p331
      %p333 = scmp.ne.s32.totalorder %s322, %s323
      %p334 = scmp.eq.s32.totalorder %s42, 0
      %p335 = por %p333, %p334
      %p336 = scmp.ne.s32.totalorder %s322, %s323
      %p337 = scmp.eq.s32.totalorder %s43, 3
      %p338 = por %p336, %p337
      %p340 = scmp.ne.s32.totalorder %s323, %s339
      %p341 = scmp.eq.s32.totalorder %s43, 0
      %p342 = por %p340, %p341
      %s343 = ssub.s32 %s45, %s52
      %p344 = scmp.eq.s32.totalorder %s343, 0
      %s346 = sadd.s32 %s345, 1
      %s347 = scalar_select %p344, %s345, %s346
      %p350 = pneg %p344
      %p351 = scmp.eq.s32.totalorder %s37, 3
      %p352 = por %p350, %p351
      %p353 = scmp.ne.s32.totalorder %s345, %s348
      %p354 = scmp.eq.s32.totalorder %s37, 0
      %p355 = por %p353, %p354
      %p356 = scmp.ne.s32.totalorder %s345, %s348
      %p357 = scmp.eq.s32.totalorder %s42, 3
      %p358 = por %p356, %p357
      %p359 = scmp.ne.s32.totalorder %s348, %s349
      %p360 = scmp.eq.s32.totalorder %s42, 0
      %p361 = por %p359, %p360
      %p362 = scmp.ne.s32.totalorder %s348, %s349
      %p363 = scmp.eq.s32.totalorder %s43, 3
      %p364 = por %p362, %p363
      %p366 = scmp.ne.s32.totalorder %s349, %s365
      %p367 = scmp.eq.s32.totalorder %s43, 0
      %p368 = por %p366, %p367
      %s369 = ssub.s32 %s45, %s52
      %p370 = scmp.eq.s32.totalorder %s369, 0
      %s372 = sadd.s32 %s371, 1
      %s373 = scalar_select %p370, %s371, %s372
      %p376 = pneg %p370
      %p377 = scmp.eq.s32.totalorder %s37, 3
      %p378 = por %p376, %p377
      %p379 = scmp.ne.s32.totalorder %s371, %s374
      %p380 = scmp.eq.s32.totalorder %s37, 0
      %p381 = por %p379, %p380
      %p382 = scmp.ne.s32.totalorder %s371, %s374
      %p383 = scmp.eq.s32.totalorder %s42, 3
      %p384 = por %p382, %p383
      %p385 = scmp.ne.s32.totalorder %s374, %s375
      %p386 = scmp.eq.s32.totalorder %s42, 0
      %p387 = por %p385, %p386
      %p388 = scmp.ne.s32.totalorder %s374, %s375
      %p389 = scmp.eq.s32.totalorder %s43, 3
      %p390 = por %p388, %p389
      %p392 = scmp.ne.s32.totalorder %s375, %s391
      %p393 = scmp.eq.s32.totalorder %s43, 0
      %p394 = por %p392, %p393
      %s395 = ssub.s32 %s45, %s52
      %p396 = scmp.eq.s32.totalorder %s395, 0
      %s398 = sadd.s32 %s397, 1
      %s399 = scalar_select %p396, %s397, %s398
      %p402 = pneg %p396
      %p403 = scmp.eq.s32.totalorder %s37, 3
      %p404 = por %p402, %p403
      %p405 = scmp.ne.s32.totalorder %s397, %s400
      %p406 = scmp.eq.s32.totalorder %s37, 0
      %p407 = por %p405, %p406
      %p408 = scmp.ne.s32.totalorder %s397, %s400
      %p409 = scmp.eq.s32.totalorder %s42, 3
      %p410 = por %p408, %p409
      %p411 = scmp.ne.s32.totalorder %s400, %s401
      %p412 = scmp.eq.s32.totalorder %s42, 0
      %p413 = por %p411, %p412
      %p414 = scmp.ne.s32.totalorder %s400, %s401
      %p415 = scmp.eq.s32.totalorder %s43, 3
      %p416 = por %p414, %p415
      %p418 = scmp.ne.s32.totalorder %s401, %s417
      %p419 = scmp.eq.s32.totalorder %s43, 0
      %p420 = por %p418, %p419
      %s422 = sadd.s32 %s421, 1
      %p425 = scmp.eq.s32.totalorder %s37, 3
      %p426 = scmp.ne.s32.totalorder %s421, %s423
      %p427 = scmp.eq.s32.totalorder %s37, 0
      %p428 = por %p426, %p427
      %p429 = scmp.ne.s32.totalorder %s421, %s423
      %p430 = scmp.eq.s32.totalorder %s42, 3
      %p431 = por %p429, %p430
      %p432 = scmp.ne.s32.totalorder %s423, %s424
      %p433 = scmp.eq.s32.totalorder %s42, 0
      %p434 = por %p432, %p433
      %p435 = scmp.ne.s32.totalorder %s423, %s424
      %p436 = scmp.eq.s32.totalorder %s43, 3
      %p437 = por %p435, %p436
      %p439 = scmp.ne.s32.totalorder %s424, %s438
      %p440 = scmp.eq.s32.totalorder %s43, 0
      %p441 = por %p439, %p440
      %s443 = sadd.s32 %s442, 1
      %p446 = scmp.eq.s32.totalorder %s37, 3
      %p447 = scmp.ne.s32.totalorder %s442, %s444
      %p448 = scmp.eq.s32.totalorder %s37, 0
      %p449 = por %p447, %p448
      %p450 = scmp.ne.s32.totalorder %s442, %s444
      %p451 = scmp.eq.s32.totalorder %s42, 3
      %p452 = por %p450, %p451
      %p453 = scmp.ne.s32.totalorder %s444, %s445
      %p454 = scmp.eq.s32.totalorder %s42, 0
      %p455 = por %p453, %p454
      %p456 = scmp.ne.s32.totalorder %s444, %s445
      %p457 = scmp.eq.s32.totalorder %s43, 3
      %p458 = por %p456, %p457
      %p460 = scmp.ne.s32.totalorder %s445, %s459
      %p461 = scmp.eq.s32.totalorder %s43, 0
      %p462 = por %p460, %p461
      %s463 = ssub.s32 %s44, %s56
      %p464 = scmp.eq.s32.totalorder %s463, 0
      %s466 = sadd.s32 %s465, 1
      %s467 = scalar_select %p464, %s465, %s466
      %p470 = pneg %p464
      %p471 = scmp.eq.s32.totalorder %s37, 3
      %p472 = por %p470, %p471
      %p473 = scmp.ne.s32.totalorder %s465, %s468
      %p474 = scmp.eq.s32.totalorder %s37, 0
      %p475 = por %p473, %p474
      %p476 = scmp.ne.s32.totalorder %s465, %s468
      %p477 = scmp.eq.s32.totalorder %s42, 3
      %p478 = por %p476, %p477
      %p479 = scmp.ne.s32.totalorder %s468, %s469
      %p480 = scmp.eq.s32.totalorder %s42, 0
      %p481 = por %p479, %p480
      %p482 = scmp.ne.s32.totalorder %s468, %s469
      %p483 = scmp.eq.s32.totalorder %s43, 3
      %p484 = por %p482, %p483
      %p486 = scmp.ne.s32.totalorder %s469, %s485
      %p487 = scmp.eq.s32.totalorder %s43, 0
      %p488 = por %p486, %p487
      %p489 = scmp.le.s32.totalorder 1, %s37
      %p490 = scmp.lt.s32.totalorder %s37, 5
      %p491 = pnand %p489, %p490
      %p492 = pneg %p491
      // Predicated region
      $region9: #{life_advisor_forward.1} parent=5 // pred_check
        _
      $region10: #{life_advisor_forward.1} parent=5 // pred_check_branch
        %494 = sbr.rel (%p491) target = $region12
      $region11: #{life_advisor_forward.1} parent=5 // pred_region
        %s495 = ssub.s32 %s37, 1
        // Predicated region
        $region13: #{life_advisor_forward.1} parent=11 // pred_check
          %p496 = pneg %p434
        $region14: #{life_advisor_forward.1} parent=11 // pred_check_branch
          %498 = sbr.rel (%p496) target = $region16
        $region15: #{life_advisor_forward.1} parent=11 // pred_region
          _
        $region16: #{life_advisor_forward.1} parent=11 // pred_fallthru
          _
        // Predicated region
        $region17: #{life_advisor_forward.1} parent=11 // pred_check
          %p499 = pneg %p455
        $region18: #{life_advisor_forward.1} parent=11 // pred_check_branch
          %501 = sbr.rel (%p499) target = $region20
        $region19: #{life_advisor_forward.1} parent=11 // pred_region
          _
        $region20: #{life_advisor_forward.1} parent=11 // pred_fallthru
          _
      $region12: #{life_advisor_forward.1} parent=5 // pred_fallthru
        _
      %p502 = scmp.lt.s32.totalorder %s37, 4
      // Predicated region
      $region21: #{life_advisor_forward.1} parent=5 // pred_check
        %p503 = pneg %p502
      $region22: #{life_advisor_forward.1} parent=5 // pred_check_branch
        %505 = sbr.rel (%p503) target = $region24
      $region23: #{life_advisor_forward.1} parent=5 // pred_region
        // Predicated region
        $region25: #{life_advisor_forward.1} parent=23 // pred_check
          %p506 = pneg %p69
        $region26: #{life_advisor_forward.1} parent=23 // pred_check_branch
          %508 = sbr.rel (%p506) target = $region28
        $region27: #{life_advisor_forward.1} parent=23 // pred_region
          %p509 = scmp.lt.s32.totalorder %s44, 1
          %s510 = scalar_select %p509, %s44, 1
          %s511 = scalar_lea.vmem %s0, %s510
        $region28: #{life_advisor_forward.1} parent=23 // pred_fallthru
          _
        // Predicated region
        $region29: #{life_advisor_forward.1} parent=23 // pred_check
          %p512 = pneg %p95
        $region30: #{life_advisor_forward.1} parent=23 // pred_check_branch
          %514 = sbr.rel (%p512) target = $region32
        $region31: #{life_advisor_forward.1} parent=23 // pred_region
          %s515 = smul.u32 2, %s44
          %p516 = scmp.lt.s32.totalorder %s515, 3
          %s517 = scalar_select %p516, %s515, 3
          %s518 = smul.addr %s517, 8
          %s519 = scalar_lea.vmem %s1, %s518
          %s520 = smul.u32 2, %s44
        $region32: #{life_advisor_forward.1} parent=23 // pred_fallthru
          _
        // Predicated region
        $region33: #{life_advisor_forward.1} parent=23 // pred_check
          %p521 = pneg %p121
        $region34: #{life_advisor_forward.1} parent=23 // pred_check_branch
          %523 = sbr.rel (%p521) target = $region36
        $region35: #{life_advisor_forward.1} parent=23 // pred_region
          %p524 = scmp.lt.s32.totalorder %s45, 1
          %s525 = scalar_select %p524, %s45, 1
          %s526 = smul.addr %s525, 48
          %s527 = smul.addr %s526, 4
          %s528 = scalar_lea.vmem %s2, %s527
        $region36: #{life_advisor_forward.1} parent=23 // pred_fallthru
          _
        // Predicated region
        $region37: #{life_advisor_forward.1} parent=23 // pred_check
          %p529 = pneg %p147
        $region38: #{life_advisor_forward.1} parent=23 // pred_check_branch
          %531 = sbr.rel (%p529) target = $region40
        $region39: #{life_advisor_forward.1} parent=23 // pred_region
          %s532 = sand.u32 %s137, 1
          %s533 = scalar_lea.sflag [#allocation4], %s532
          %s534 = sand.u32 %s137, 1
          %s535 = smul.addr %s534, 3
          %s536 = scalar_lea.vmem [#allocation3], %s535
          %s538 = ssub.s32 48, 48
          %539 = vsyncadd %s533, %s538
          %s540 = smul.addr %s45, 3
          %s541 = smul.addr %s540, 16
          %s542 = scalar_lea.hbm %s3, %s541
          %s544 = sshll.u32 %s536, 4
          %s545 = int_to_ptr.vmem [resolvable:$true] %s544
          %547 = dma.hbm_to_vmem [thread:$0]  %s542, 48, %s545, %s533
        $region40: #{life_advisor_forward.1} parent=23 // pred_fallthru
          _
        // Predicated region
        $region41: #{life_advisor_forward.1} parent=23 // pred_check
          %p548 = pneg %p173
        $region42: #{life_advisor_forward.1} parent=23 // pred_check_branch
          %550 = sbr.rel (%p548) target = $region44
        $region43: #{life_advisor_forward.1} parent=23 // pred_region
          %p551 = scmp.lt.s32.totalorder %s45, 1
          %s552 = scalar_select %p551, %s45, 1
          %s553 = smul.addr %s552, 16
          %s554 = smul.addr %s553, 4
          %s555 = scalar_lea.vmem %s4, %s554
        $region44: #{life_advisor_forward.1} parent=23 // pred_fallthru
          _
        // Predicated region
        $region45: #{life_advisor_forward.1} parent=23 // pred_check
          %p556 = pneg %p199
        $region46: #{life_advisor_forward.1} parent=23 // pred_check_branch
          %558 = sbr.rel (%p556) target = $region48
        $region47: #{life_advisor_forward.1} parent=23 // pred_region
          %s559 = sand.u32 %s37, 1
          %s560 = scalar_lea.sflag [#allocation6], %s559
          %s561 = sand.u32 %s189, 1
          %s562 = scalar_lea.vmem [#allocation5], %s561
          %s564 = ssub.s32 16, 16
          %565 = vsyncadd %s560, %s564
          %s566 = smul.addr %s45, 16
          %s567 = scalar_lea.hbm %s5, %s566
          %s569 = sshll.u32 %s562, 4
          %s570 = int_to_ptr.vmem [resolvable:$true] %s569
          %572 = dma.hbm_to_vmem [thread:$0]  %s567, 16, %s570, %s560
        $region48: #{life_advisor_forward.1} parent=23 // pred_fallthru
          _
        // Predicated region
        $region49: #{life_advisor_forward.1} parent=23 // pred_check
          %p573 = pneg %p225
        $region50: #{life_advisor_forward.1} parent=23 // pred_check_branch
          %575 = sbr.rel (%p573) target = $region52
        $region51: #{life_advisor_forward.1} parent=23 // pred_region
          %s576 = sand.u32 %s37, 1
          %s577 = scalar_lea.sflag [#allocation6], %s576
          %s578 = sand.u32 %s215, 1
          %s579 = scalar_lea.vmem [#allocation7], %s578
          %s581 = ssub.s32 16, 16
          %582 = vsyncadd %s577, %s581
          %s583 = smul.addr %s45, 16
          %s584 = scalar_lea.hbm %s6, %s583
          %s586 = sshll.u32 %s579, 4
          %s587 = int_to_ptr.vmem [resolvable:$true] %s586
          %589 = dma.hbm_to_vmem [thread:$0]  %s584, 16, %s587, %s577
        $region52: #{life_advisor_forward.1} parent=23 // pred_fallthru
          _
        // Predicated region
        $region53: #{life_advisor_forward.1} parent=23 // pred_check
          %p590 = pneg %p251
        $region54: #{life_advisor_forward.1} parent=23 // pred_check_branch
          %592 = sbr.rel (%p590) target = $region56
        $region55: #{life_advisor_forward.1} parent=23 // pred_region
          %s593 = sand.u32 %s37, 1
          %s594 = scalar_lea.sflag [#allocation9], %s593
          %s595 = sand.u32 %s241, 1
          %s596 = scalar_lea.vmem [#allocation8], %s595
          %s598 = ssub.s32 16, 16
          %599 = vsyncadd %s594, %s598
          %s600 = smul.addr %s45, 16
          %s601 = scalar_lea.hbm %s7, %s600
          %s603 = sshll.u32 %s596, 4
          %s604 = int_to_ptr.vmem [resolvable:$true] %s603
          %606 = dma.hbm_to_vmem [thread:$0]  %s601, 16, %s604, %s594
        $region56: #{life_advisor_forward.1} parent=23 // pred_fallthru
          _
        // Predicated region
        $region57: #{life_advisor_forward.1} parent=23 // pred_check
          %p607 = pneg %p277
        $region58: #{life_advisor_forward.1} parent=23 // pred_check_branch
          %609 = sbr.rel (%p607) target = $region60
        $region59: #{life_advisor_forward.1} parent=23 // pred_region
          %s610 = sand.u32 %s37, 1
          %s611 = scalar_lea.sflag [#allocation9], %s610
          %s612 = sand.u32 %s267, 1
          %s613 = smul.addr %s612, 128
          %s614 = scalar_lea.vmem [#allocation10], %s613
          %s616 = ssub.s32 2048, 2048
          %617 = vsyncadd %s611, %s616
          %s618 = smul.addr %s45, 32
          %s619 = smul.addr %s618, 64
          %s620 = scalar_lea.hbm %s8, %s619
          %s621 = sshll.u32 %s614, 4
          %s622 = int_to_ptr.vmem [resolvable:$true] %s621
          %627 = dma.hbm_to_vmem [thread:$0]  %s620, 2048, %s622, %s611, 128, 128, 8
        $region60: #{life_advisor_forward.1} parent=23 // pred_fallthru
          _
        // Predicated region
        $region61: #{life_advisor_forward.1} parent=23 // pred_check
          %p628 = pneg %p303
        $region62: #{life_advisor_forward.1} parent=23 // pred_check_branch
          %630 = sbr.rel (%p628) target = $region64
        $region63: #{life_advisor_forward.1} parent=23 // pred_region
          %p631 = scmp.lt.s32.totalorder %s45, 1
          %s632 = scalar_select %p631, %s45, 1
          %s633 = smul.addr %s632, 2
          %s634 = scalar_lea.vmem %s9, %s633
        $region64: #{life_advisor_forward.1} parent=23 // pred_fallthru
          _
        // Predicated region
        $region65: #{life_advisor_forward.1} parent=23 // pred_check
          %p635 = pneg %p329
        $region66: #{life_advisor_forward.1} parent=23 // pred_check_branch
          %637 = sbr.rel (%p635) target = $region68
        $region67: #{life_advisor_forward.1} parent=23 // pred_region
          %s638 = sand.u32 %s37, 1
          %s639 = scalar_lea.sflag [#allocation12], %s638
          %s640 = sand.u32 %s319, 1
          %s641 = smul.addr %s640, 128
          %s642 = scalar_lea.vmem [#allocation11], %s641
          %s644 = ssub.s32 2048, 2048
          %645 = vsyncadd %s639, %s644
          %s646 = smul.addr %s45, 32
          %s647 = smul.addr %s646, 64
          %s648 = scalar_lea.hbm %s10, %s647
          %s649 = sshll.u32 %s642, 4
          %s650 = int_to_ptr.vmem [resolvable:$true] %s649
          %655 = dma.hbm_to_vmem [thread:$0]  %s648, 2048, %s650, %s639, 64, 64, 4
        $region68: #{life_advisor_forward.1} parent=23 // pred_fallthru
          _
        // Predicated region
        $region69: #{life_advisor_forward.1} parent=23 // pred_check
          %p656 = pneg %p355
        $region70: #{life_advisor_forward.1} parent=23 // pred_check_branch
          %658 = sbr.rel (%p656) target = $region72
        $region71: #{life_advisor_forward.1} parent=23 // pred_region
          %p659 = scmp.lt.s32.totalorder %s45, 1
          %s660 = scalar_select %p659, %s45, 1
          %s661 = scalar_lea.vmem %s11, %s660
        $region72: #{life_advisor_forward.1} parent=23 // pred_fallthru
          _
        // Predicated region
        $region73: #{life_advisor_forward.1} parent=23 // pred_check
          %p662 = pneg %p381
        $region74: #{life_advisor_forward.1} parent=23 // pred_check_branch
          %664 = sbr.rel (%p662) target = $region76
        $region75: #{life_advisor_forward.1} parent=23 // pred_region
          %s665 = sand.u32 %s37, 1
          %s666 = scalar_lea.sflag [#allocation12], %s665
          %s667 = sand.u32 %s371, 1
          %s668 = scalar_lea.vmem [#allocation13], %s667
          %s670 = ssub.s32 16, 16
          %671 = vsyncadd %s666, %s670
          %s672 = smul.addr %s45, 16
          %s673 = scalar_lea.hbm %s12, %s672
          %s675 = sshll.u32 %s668, 4
          %s676 = int_to_ptr.vmem [resolvable:$true] %s675
          %678 = dma.hbm_to_vmem [thread:$0]  %s673, 16, %s676, %s666
        $region76: #{life_advisor_forward.1} parent=23 // pred_fallthru
          _
        // Predicated region
        $region77: #{life_advisor_forward.1} parent=23 // pred_check
          %p679 = pneg %p407
        $region78: #{life_advisor_forward.1} parent=23 // pred_check_branch
          %681 = sbr.rel (%p679) target = $region80
        $region79: #{life_advisor_forward.1} parent=23 // pred_region
          %s682 = sand.u32 %s397, 1
          %s683 = scalar_lea.sflag [#allocation15], %s682
          %s684 = sand.u32 %s397, 1
          %s685 = scalar_lea.vmem [#allocation14], %s684
          %s687 = ssub.s32 16, 16
          %688 = vsyncadd %s683, %s687
          %s689 = smul.addr %s45, 16
          %s690 = scalar_lea.hbm %s13, %s689
          %s692 = sshll.u32 %s685, 4
          %s693 = int_to_ptr.vmem [resolvable:$true] %s692
          %695 = dma.hbm_to_vmem [thread:$0]  %s690, 16, %s693, %s683
        $region80: #{life_advisor_forward.1} parent=23 // pred_fallthru
          _
      $region24: #{life_advisor_forward.1} parent=5 // pred_fallthru
        _
      %p696 = scmp.le.s32.totalorder 1, %s37
      %p697 = scmp.lt.s32.totalorder %s37, 5
      %p698 = pnand %p696, %p697
      %p699 = pneg %p698
      // Predicated region
      $region81: #{life_advisor_forward.1} parent=5 // pred_check
        _
      $region82: #{life_advisor_forward.1} parent=5 // pred_check_branch
        %701 = sbr.rel (%p698) target = $region84
      $region83: #{life_advisor_forward.1} parent=5 // pred_region
        %s702 = ssub.s32 %s37, 1
        %s703 = sand.u32 %s140, 1
        %s704 = scalar_lea.sflag [#allocation4], %s703
        %s705 = sand.u32 %s140, 1
        %s706 = smul.addr %s705, 3
        %s707 = scalar_lea.vmem [#allocation3], %s706
        // Predicated region
        $region85: #{life_advisor_forward.1} parent=83 // pred_check
          %p708 = pneg %p153
        $region86: #{life_advisor_forward.1} parent=83 // pred_check_branch
          %710 = sbr.rel (%p708) target = $region88
        $region87: #{life_advisor_forward.1} parent=83 // pred_region
          %711 = dma.done %s704, 48
        $region88: #{life_advisor_forward.1} parent=83 // pred_fallthru
          _
        %s712 = sand.u32 %s42, 1
        %s713 = scalar_lea.sflag [#allocation6], %s712
        %s714 = sand.u32 %s192, 1
        %s715 = scalar_lea.vmem [#allocation5], %s714
        // Predicated region
        $region89: #{life_advisor_forward.1} parent=83 // pred_check
          %p716 = pneg %p205
        $region90: #{life_advisor_forward.1} parent=83 // pred_check_branch
          %718 = sbr.rel (%p716) target = $region92
        $region91: #{life_advisor_forward.1} parent=83 // pred_region
          %719 = dma.done %s713, 16
        $region92: #{life_advisor_forward.1} parent=83 // pred_fallthru
          _
        %s720 = sand.u32 %s42, 1
        %s721 = scalar_lea.sflag [#allocation6], %s720
        %s722 = sand.u32 %s218, 1
        %s723 = scalar_lea.vmem [#allocation7], %s722
        // Predicated region
        $region93: #{life_advisor_forward.1} parent=83 // pred_check
          %p724 = pneg %p231
        $region94: #{life_advisor_forward.1} parent=83 // pred_check_branch
          %726 = sbr.rel (%p724) target = $region96
        $region95: #{life_advisor_forward.1} parent=83 // pred_region
          %727 = dma.done %s721, 16
        $region96: #{life_advisor_forward.1} parent=83 // pred_fallthru
          _
        %s728 = sand.u32 %s42, 1
        %s729 = scalar_lea.sflag [#allocation9], %s728
        %s730 = sand.u32 %s244, 1
        %s731 = scalar_lea.vmem [#allocation8], %s730
        // Predicated region
        $region97: #{life_advisor_forward.1} parent=83 // pred_check
          %p732 = pneg %p257
        $region98: #{life_advisor_forward.1} parent=83 // pred_check_branch
          %734 = sbr.rel (%p732) target = $region100
        $region99: #{life_advisor_forward.1} parent=83 // pred_region
          %735 = dma.done %s729, 16
        $region100: #{life_advisor_forward.1} parent=83 // pred_fallthru
          _
        %s736 = sand.u32 %s42, 1
        %s737 = scalar_lea.sflag [#allocation9], %s736
        %s738 = sand.u32 %s270, 1
        %s739 = smul.addr %s738, 128
        %s740 = scalar_lea.vmem [#allocation10], %s739
        // Predicated region
        $region101: #{life_advisor_forward.1} parent=83 // pred_check
          %p741 = pneg %p283
        $region102: #{life_advisor_forward.1} parent=83 // pred_check_branch
          %743 = sbr.rel (%p741) target = $region104
        $region103: #{life_advisor_forward.1} parent=83 // pred_region
          %744 = dma.done %s737, 2048
        $region104: #{life_advisor_forward.1} parent=83 // pred_fallthru
          _
        %s745 = sand.u32 %s42, 1
        %s746 = scalar_lea.sflag [#allocation12], %s745
        %s747 = sand.u32 %s322, 1
        %s748 = smul.addr %s747, 128
        %s749 = scalar_lea.vmem [#allocation11], %s748
        // Predicated region
        $region105: #{life_advisor_forward.1} parent=83 // pred_check
          %p750 = pneg %p335
        $region106: #{life_advisor_forward.1} parent=83 // pred_check_branch
          %752 = sbr.rel (%p750) target = $region108
        $region107: #{life_advisor_forward.1} parent=83 // pred_region
          %753 = dma.done %s746, 2048
        $region108: #{life_advisor_forward.1} parent=83 // pred_fallthru
          _
        %s754 = sand.u32 %s42, 1
        %s755 = scalar_lea.sflag [#allocation12], %s754
        %s756 = sand.u32 %s374, 1
        %s757 = scalar_lea.vmem [#allocation13], %s756
        // Predicated region
        $region109: #{life_advisor_forward.1} parent=83 // pred_check
          %p758 = pneg %p387
        $region110: #{life_advisor_forward.1} parent=83 // pred_check_branch
          %760 = sbr.rel (%p758) target = $region112
        $region111: #{life_advisor_forward.1} parent=83 // pred_region
          %761 = dma.done %s755, 16
        $region112: #{life_advisor_forward.1} parent=83 // pred_fallthru
          _
        %s762 = sand.u32 %s400, 1
        %s763 = scalar_lea.sflag [#allocation15], %s762
        %s764 = sand.u32 %s400, 1
        %s765 = scalar_lea.vmem [#allocation14], %s764
        // Predicated region
        $region113: #{life_advisor_forward.1} parent=83 // pred_check
          %p766 = pneg %p413
        $region114: #{life_advisor_forward.1} parent=83 // pred_check_branch
          %768 = sbr.rel (%p766) target = $region116
        $region115: #{life_advisor_forward.1} parent=83 // pred_region
          %769 = dma.done %s763, 16
        $region116: #{life_advisor_forward.1} parent=83 // pred_fallthru
          _
        %p770 = scmp.lt.s32.totalorder %s46, 1
        %s771 = scalar_select %p770, %s46, 1
        %s772 = scalar_lea.vmem %s0, %s771
        %p773 = pneg %p75
        %p774 = pneg %p72
        %s775 = smul.u32 2, %s46
        %p776 = scmp.lt.s32.totalorder %s775, 3
        %s777 = scalar_select %p776, %s775, 3
        %s778 = smul.addr %s777, 8
        %s779 = scalar_lea.vmem %s1, %s778
        %p780 = pneg %p101
        %p781 = pneg %p98
        %p782 = scmp.lt.s32.totalorder %s47, 1
        %s783 = scalar_select %p782, %s47, 1
        %s784 = smul.addr %s783, 48
        %s785 = smul.addr %s784, 4
        %s786 = scalar_lea.vmem %s2, %s785
        %p787 = pneg %p127
        %p788 = pneg %p124
        %s789 = sand.u32 %s140, 1
        %s790 = scalar_lea.sflag [#allocation4], %s789
        %s791 = sand.u32 %s140, 1
        %s792 = smul.addr %s791, 3
        %s793 = scalar_lea.vmem [#allocation3], %s792
        %p794 = pneg %p153
        %p795 = pneg %p150
        %p796 = scmp.lt.s32.totalorder %s47, 1
        %s797 = scalar_select %p796, %s47, 1
        %s798 = smul.addr %s797, 16
        %s799 = smul.addr %s798, 4
        %s800 = scalar_lea.vmem %s4, %s799
        %p801 = pneg %p179
        %p802 = pneg %p176
        %s803 = sand.u32 %s42, 1
        %s804 = scalar_lea.sflag [#allocation6], %s803
        %s805 = sand.u32 %s192, 1
        %s806 = scalar_lea.vmem [#allocation5], %s805
        %p807 = pneg %p205
        %p808 = pneg %p202
        %s809 = sand.u32 %s42, 1
        %s810 = scalar_lea.sflag [#allocation6], %s809
        %s811 = sand.u32 %s218, 1
        %s812 = scalar_lea.vmem [#allocation7], %s811
        %p813 = pneg %p231
        %p814 = pneg %p228
        %s815 = sand.u32 %s42, 1
        %s816 = scalar_lea.sflag [#allocation9], %s815
        %s817 = sand.u32 %s244, 1
        %s818 = scalar_lea.vmem [#allocation8], %s817
        %p819 = pneg %p257
        %p820 = pneg %p254
        %s821 = sand.u32 %s42, 1
        %s822 = scalar_lea.sflag [#allocation9], %s821
        %s823 = sand.u32 %s270, 1
        %s824 = smul.addr %s823, 128
        %s825 = scalar_lea.vmem [#allocation10], %s824
        %p826 = pneg %p283
        %p827 = pneg %p280
        %p828 = scmp.lt.s32.totalorder %s47, 1
        %s829 = scalar_select %p828, %s47, 1
        %s830 = smul.addr %s829, 2
        %s831 = scalar_lea.vmem %s9, %s830
        %p832 = pneg %p309
        %p833 = pneg %p306
        %s834 = sand.u32 %s42, 1
        %s835 = scalar_lea.sflag [#allocation12], %s834
        %s836 = sand.u32 %s322, 1
        %s837 = smul.addr %s836, 128
        %s838 = scalar_lea.vmem [#allocation11], %s837
        %p839 = pneg %p335
        %p840 = pneg %p332
        %p841 = scmp.lt.s32.totalorder %s47, 1
        %s842 = scalar_select %p841, %s47, 1
        %s843 = scalar_lea.vmem %s11, %s842
        %p844 = pneg %p361
        %p845 = pneg %p358
        %s846 = sand.u32 %s42, 1
        %s847 = scalar_lea.sflag [#allocation12], %s846
        %s848 = sand.u32 %s374, 1
        %s849 = scalar_lea.vmem [#allocation13], %s848
        %p850 = pneg %p387
        %p851 = pneg %p384
        %s852 = sand.u32 %s400, 1
        %s853 = scalar_lea.sflag [#allocation15], %s852
        %s854 = sand.u32 %s400, 1
        %s855 = scalar_lea.vmem [#allocation14], %s854
        %p856 = pneg %p413
        %p857 = pneg %p410
        %p858 = pneg %p434
        %p859 = pneg %p431
        %p860 = pneg %p455
        %p861 = pneg %p452
        %p862 = pneg %p481
        %p863 = pneg %p478
        %p864 = scmp.lt.s32.totalorder %s46, 1
        %s865 = scalar_select %p864, %s46, 1
        %s866 = smul.addr %s865, 8
        %s867 = scalar_lea.vmem %s16, %s866
        %p868 = scmp.lt.s32.totalorder %s46, 1
        %s869 = scalar_select %p868, %s46, 1
        %s870 = scalar_lea.vmem %s0, %s869
        %s871 = smul.u32 2, %s46
        %p872 = scmp.lt.s32.totalorder %s871, 3
        %s873 = scalar_select %p872, %s871, 3
        %s874 = smul.addr %s873, 8
        %s875 = scalar_lea.vmem %s1, %s874
        %s876 = smul.u32 2, %s46
        %p877 = scmp.lt.s32.totalorder %s47, 1
        %s878 = scalar_select %p877, %s47, 1
        %s879 = smul.addr %s878, 48
        %s880 = smul.addr %s879, 4
        %s881 = scalar_lea.vmem %s2, %s880
        %p882 = scmp.lt.s32.totalorder %s47, 1
        %s883 = scalar_select %p882, %s47, 1
        %s884 = smul.addr %s883, 16
        %s885 = smul.addr %s884, 4
        %s886 = scalar_lea.vmem %s4, %s885
        %p887 = scmp.lt.s32.totalorder %s47, 1
        %s888 = scalar_select %p887, %s47, 1
        %s889 = smul.addr %s888, 2
        %s890 = scalar_lea.vmem %s9, %s889
        %p891 = scmp.lt.s32.totalorder %s47, 1
        %s892 = scalar_select %p891, %s47, 1
        %s893 = scalar_lea.vmem %s11, %s892
        %p894 = scmp.lt.s32.totalorder %s46, 1
        %s895 = scalar_select %p894, %s46, 1
        %s896 = smul.addr %s895, 8
        %s897 = scalar_lea.vmem %s16, %s896
        %p899 = scmp.eq.s32.totalorder %s47, 0
        // Predicated region
        $region117: #{life_advisor_forward.1} parent=83 // pred_check
          %p900 = pneg %p899
        $region118: #{life_advisor_forward.1} parent=83 // pred_check_branch
          %902 = sbr.rel (%p900) target = $region120
        $region119: #{life_advisor_forward.1} parent=83 // pred_region
          %v903 = vld [vmem:[%s875] sm:$0xff]
          %v904 = vld [vmem:[%s875 + $0x8] sm:$0xff]
          %905 = vst [vmem:[#allocation2] sm:$0xff] %v903
          %906 = vst [vmem:[#allocation2 + $0x8] sm:$0xff] %v904
        $region120: #{life_advisor_forward.1} parent=83 // pred_fallthru
          _
        %v907 = vld [vmem:[#allocation2] sm:$0xff]
        %v908 = vld [vmem:[#allocation2 + $0x8] sm:$0xff]
        %v909 = vld [vmem:[%s870] sm:$0x1]
        %v910 = vpack.c.bf16 %v908, %v907
        %v911 = vld [vmem:[%s881] sm:$0xff]
        %v912 = vld [vmem:[%s881 + $0x8] sm:$0xf]
        %v913 = vld [vmem:[%s881 + $0xc] sm:$0xff]
        %v914 = vld [vmem:[%s881 + $0x14] sm:$0xf]
        %v915 = vld [vmem:[%s881 + $0x18] sm:$0xff]
        %v916 = vld [vmem:[%s881 + $0x20] sm:$0xf]
        %v917 = vld [vmem:[%s881 + $0x24] sm:$0xff]
        %v918 = vld [vmem:[%s881 + $0x2c] sm:$0xf]
        %v919 = vld [vmem:[%s881 + $0x30] sm:$0xff]
        %v920 = vld [vmem:[%s881 + $0x38] sm:$0xf]
        %v921 = vld [vmem:[%s881 + $0x3c] sm:$0xff]
        %v922 = vld [vmem:[%s881 + $0x44] sm:$0xf]
        %v923 = vld [vmem:[%s881 + $0x48] sm:$0xff]
        %v924 = vld [vmem:[%s881 + $0x50] sm:$0xf]
        %v925 = vld [vmem:[%s881 + $0x54] sm:$0xff]
        %v926 = vld [vmem:[%s881 + $0x5c] sm:$0xf]
        %v927 = vld [vmem:[%s881 + $0x60] sm:$0xff]
        %v928 = vld [vmem:[%s881 + $0x68] sm:$0xf]
        %v929 = vld [vmem:[%s881 + $0x6c] sm:$0xff]
        %v930 = vld [vmem:[%s881 + $0x74] sm:$0xf]
        %v931 = vld [vmem:[%s881 + $0x78] sm:$0xff]
        %v932 = vld [vmem:[%s881 + $0x80] sm:$0xf]
        %v933 = vld [vmem:[%s881 + $0x84] sm:$0xff]
        %v934 = vld [vmem:[%s881 + $0x8c] sm:$0xf]
        %v935 = vld [vmem:[%s881 + $0x90] sm:$0xff]
        %v936 = vld [vmem:[%s881 + $0x98] sm:$0xf]
        %v937 = vld [vmem:[%s881 + $0x9c] sm:$0xff]
        %v938 = vld [vmem:[%s881 + $0xa4] sm:$0xf]
        %v939 = vld [vmem:[%s881 + $0xa8] sm:$0xff]
        %v940 = vld [vmem:[%s881 + $0xb0] sm:$0xf]
        %v941 = vld [vmem:[%s881 + $0xb4] sm:$0xff]
        %v942 = vld [vmem:[%s881 + $0xbc] sm:$0xf]
        %v943 = vld [vmem:[%s707] sm:$0x7]
        %v945 = vlaneseq
        %v946 = vshrl.u32 %v945, 7
        %v947 = vsub.s32 0, %v946
        %v948 = vrot.slane %v943, %v947
        %v949 = vlaneseq
        %v950 = vshrl.u32 %v949, 7
        %v951 = vsub.s32 1, %v950
        %v952 = vrot.slane %v943, %v951
        %v953 = vlaneseq
        %v954 = vshrl.u32 %v953, 7
        %v955 = vsub.s32 2, %v954
        %v956 = vrot.slane %v943, %v955
        %v992 = vunpack.c.l.b16 %v911
        %v993 = vunpack.c.h.b16 %v911
        %v994 = vunpack.c.l.b16 %v912
        %v995 = vunpack.c.l.b16 %v913
        %v996 = vunpack.c.h.b16 %v913
        %v997 = vunpack.c.l.b16 %v914
        %v998 = vunpack.c.l.b16 %v915
        %v999 = vunpack.c.h.b16 %v915
        %v1000 = vunpack.c.l.b16 %v916
        %v1001 = vunpack.c.l.b16 %v917
        %v1002 = vunpack.c.h.b16 %v917
        %v1003 = vunpack.c.l.b16 %v918
        %v1004 = vunpack.c.l.b16 %v919
        %v1005 = vunpack.c.h.b16 %v919
        %v1006 = vunpack.c.l.b16 %v920
        %v1007 = vunpack.c.l.b16 %v921
        %v1008 = vunpack.c.h.b16 %v921
        %v1009 = vunpack.c.l.b16 %v922
        %v1010 = vunpack.c.l.b16 %v923
        %v1011 = vunpack.c.h.b16 %v923
        %v1012 = vunpack.c.l.b16 %v924
        %v1013 = vunpack.c.l.b16 %v925
        %v1014 = vunpack.c.h.b16 %v925
        %v1015 = vunpack.c.l.b16 %v926
        %v1016 = vunpack.c.l.b16 %v927
        %v1017 = vunpack.c.h.b16 %v927
        %v1018 = vunpack.c.l.b16 %v928
        %v1019 = vunpack.c.l.b16 %v929
        %v1020 = vunpack.c.h.b16 %v929
        %v1021 = vunpack.c.l.b16 %v930
        %v1022 = vunpack.c.l.b16 %v931
        %v1023 = vunpack.c.h.b16 %v931
        %v1024 = vunpack.c.l.b16 %v932
        %v1025 = vunpack.c.l.b16 %v933
        %v1026 = vunpack.c.h.b16 %v933
        %v1027 = vunpack.c.l.b16 %v934
        %v1028 = vunpack.c.l.b16 %v935
        %v1029 = vunpack.c.h.b16 %v935
        %v1030 = vunpack.c.l.b16 %v936
        %v1031 = vunpack.c.l.b16 %v937
        %v1032 = vunpack.c.h.b16 %v937
        %v1033 = vunpack.c.l.b16 %v938
        %v1034 = vunpack.c.l.b16 %v939
        %v1035 = vunpack.c.h.b16 %v939
        %v1036 = vunpack.c.l.b16 %v940
        %v1037 = vunpack.c.l.b16 %v941
        %v1038 = vunpack.c.h.b16 %v941
        %v1039 = vunpack.c.l.b16 %v942
        %v1040 = vpack.c.b16 %v995, %v992
        %v1041 = vpack.c.b16 %v996, %v993
        %v1042 = vpack.c.b16 %v997, %v994
        %v1043 = vpack.c.b16 %v1001, %v998
        %v1044 = vpack.c.b16 %v1002, %v999
        %v1045 = vpack.c.b16 %v1003, %v1000
        %v1046 = vpack.c.b16 %v1007, %v1004
        %v1047 = vpack.c.b16 %v1008, %v1005
        %v1048 = vpack.c.b16 %v1009, %v1006
        %v1049 = vpack.c.b16 %v1013, %v1010
        %v1050 = vpack.c.b16 %v1014, %v1011
        %v1051 = vpack.c.b16 %v1015, %v1012
        %v1052 = vpack.c.b16 %v1019, %v1016
        %v1053 = vpack.c.b16 %v1020, %v1017
        %v1054 = vpack.c.b16 %v1021, %v1018
        %v1055 = vpack.c.b16 %v1025, %v1022
        %v1056 = vpack.c.b16 %v1026, %v1023
        %v1057 = vpack.c.b16 %v1027, %v1024
        %v1058 = vpack.c.b16 %v1031, %v1028
        %v1059 = vpack.c.b16 %v1032, %v1029
        %v1060 = vpack.c.b16 %v1033, %v1030
        %v1061 = vpack.c.b16 %v1037, %v1034
        %v1062 = vpack.c.b16 %v1038, %v1035
        %v1063 = vpack.c.b16 %v1039, %v1036
        %1088 = vmatprep.subr.bf16.mxu0 %v1041
        %1089 = vmatpush1.bf16.msra.mxu0 %v1040
        %1090 = vmatprep.subr.bf16.mxu0 %v1044
        %1091 = vmatpush1.bf16.msra.mxu0 %v1043
        %1092 = vmatprep.subr.bf16.mxu0 %v1047
        %1093 = vmatpush1.bf16.msra.mxu0 %v1046
        %1094 = vmatprep.subr.bf16.mxu0 %v1050
        %1095 = vmatpush1.bf16.msra.mxu0 %v1049
        %1096 = vmatprep.subr.bf16.mxu0 %v1053
        %1097 = vmatpush1.bf16.msra.mxu0 %v1052
        %1098 = vmatprep.subr.bf16.mxu0 %v1056
        %1099 = vmatpush1.bf16.msra.mxu0 %v1055
        %1100 = vmatprep.subr.bf16.mxu0 %v1059
        %1101 = vmatpush1.bf16.msra.mxu0 %v1058
        %1102 = vmatprep.subr.bf16.mxu0 %v1062
        %1103 = vmatpush1.bf16.msra.mxu0 %v1061
        %1104 = vmatprep.subr.bf16.mxu0 0
        %1105 = vmatpush1.bf16.msra.mxu0 0
        %1106 = vmatprep.subr.bf16.mxu0 0
        %1107 = vmatpush1.bf16.msra.mxu0 0
        %1108 = vmatprep.subr.bf16.mxu0 0
        %1109 = vmatpush1.bf16.msra.mxu0 0
        %1110 = vmatprep.subr.bf16.mxu0 0
        %1111 = vmatpush1.bf16.msra.mxu0 0
        %1112 = vmatprep.subr.bf16.mxu0 0
        %1113 = vmatpush1.bf16.msra.mxu0 0
        %1114 = vmatprep.subr.bf16.mxu0 0
        %1115 = vmatpush1.bf16.msra.mxu0 0
        %1116 = vmatprep.subr.bf16.mxu0 0
        %1117 = vmatpush1.bf16.msra.mxu0 0
        %1118 = vmatprep.subr.bf16.mxu0 0
        %1119 = vmatpush1.bf16.msra.mxu0 0
        %1120 = vmatprep.mubr.bf16.mxu0 0
        %1121 = vmatmul.mubr.bf16.gmra.mrb[0].mxu0 %v910
        %v1122 = vpop.f32.mrb[0].mxu0
        %v1123 = vadd.f32 %v948, %v1122
        %v1124 = vpop.f32.mrb[0].mxu0
        %v1125 = vadd.f32 %v952, %v1124
        %v1126 = vpop.f32.mrb[0].mxu0
        %v1127 = vadd.f32 %v948, %v1126
        %v1128 = vpop.f32.mrb[0].mxu0
        %v1129 = vadd.f32 %v952, %v1128
        %1130 = vdwg.mxu0
        %1131 = vmatprep.subr.bf16.mxu0 0
        %1132 = vmatpush1.bf16.msra.mxu0 %v1042
        %1133 = vmatprep.subr.bf16.mxu0 0
        %1134 = vmatpush1.bf16.msra.mxu0 %v1045
        %1135 = vmatprep.subr.bf16.mxu0 0
        %1136 = vmatpush1.bf16.msra.mxu0 %v1048
        %1137 = vmatprep.subr.bf16.mxu0 0
        %1138 = vmatpush1.bf16.msra.mxu0 %v1051
        %1139 = vmatprep.subr.bf16.mxu0 0
        %1140 = vmatpush1.bf16.msra.mxu0 %v1054
        %1141 = vmatprep.subr.bf16.mxu0 0
        %1142 = vmatpush1.bf16.msra.mxu0 %v1057
        %1143 = vmatprep.subr.bf16.mxu0 0
        %1144 = vmatpush1.bf16.msra.mxu0 %v1060
        %1145 = vmatprep.subr.bf16.mxu0 0
        %1146 = vmatpush1.bf16.msra.mxu0 %v1063
        %1147 = vmatprep.subr.bf16.mxu0 0
        %1148 = vmatpush1.bf16.msra.mxu0 0
        %1149 = vmatprep.subr.bf16.mxu0 0
        %1150 = vmatpush1.bf16.msra.mxu0 0
        %1151 = vmatprep.subr.bf16.mxu0 0
        %1152 = vmatpush1.bf16.msra.mxu0 0
        %1153 = vmatprep.subr.bf16.mxu0 0
        %1154 = vmatpush1.bf16.msra.mxu0 0
        %1155 = vmatprep.subr.bf16.mxu0 0
        %1156 = vmatpush1.bf16.msra.mxu0 0
        %1157 = vmatprep.subr.bf16.mxu0 0
        %1158 = vmatpush1.bf16.msra.mxu0 0
        %1159 = vmatprep.subr.bf16.mxu0 0
        %1160 = vmatpush1.bf16.msra.mxu0 0
        %1161 = vmatprep.subr.bf16.mxu0 0
        %1162 = vmatpush1.bf16.msra.mxu0 0
        %1163 = vmatprep.mubr.bf16.mxu0 0
        %1164 = vmatmul.mubr.bf16.gmra.mrb[0].mxu0 %v910
        %v1165 = vpop.f32.mrb[0].mxu0
        %v1166 = vadd.f32 %v956, %v1165
        %v1167 = vpop.f32.mrb[0].mxu0
        %v1168 = vpop.f32.mrb[0].mxu0
        %v1169 = vadd.f32 %v956, %v1168
        %v1170 = vpop.f32.mrb[0].mxu0
        %1171 = vdwg.mxu0
        %v1172 = vld [vmem:[%s886] sm:$0xf]
        %v1173 = vld [vmem:[%s886 + $0x4] sm:$0xf]
        %v1174 = vld [vmem:[%s886 + $0x8] sm:$0xf]
        %v1175 = vld [vmem:[%s886 + $0xc] sm:$0xf]
        %v1176 = vld [vmem:[%s886 + $0x10] sm:$0xf]
        %v1177 = vld [vmem:[%s886 + $0x14] sm:$0xf]
        %v1178 = vld [vmem:[%s886 + $0x18] sm:$0xf]
        %v1179 = vld [vmem:[%s886 + $0x1c] sm:$0xf]
        %v1180 = vld [vmem:[%s886 + $0x20] sm:$0xf]
        %v1181 = vld [vmem:[%s886 + $0x24] sm:$0xf]
        %v1182 = vld [vmem:[%s886 + $0x28] sm:$0xf]
        %v1183 = vld [vmem:[%s886 + $0x2c] sm:$0xf]
        %v1184 = vld [vmem:[%s886 + $0x30] sm:$0xf]
        %v1185 = vld [vmem:[%s886 + $0x34] sm:$0xf]
        %v1186 = vld [vmem:[%s886 + $0x38] sm:$0xf]
        %v1187 = vld [vmem:[%s886 + $0x3c] sm:$0xf]
        %v1188 = vpack.c.bf16 %v1127, %v1123
        %v1189 = vpack.c.bf16 %v1129, %v1125
        %v1190 = vpack.c.bf16 %v1169, %v1166
        %vm1191 = vcmask 261120
        %v1193 = vsel %vm1191, %v1188, 0
        %v1196 = vsel %vm1191, %v1189, 0
        %1198 = vmatprep.subr.bf16.mxu0 0
        %1199 = vmatpush1.bf16.xpose.msra.mxu0 %v1196
        %1200 = vmatprep.subr.bf16.mxu0 0
        %1201 = vmatpush1.bf16.xpose.msra.mxu0 0
        %1202 = vmatprep.subr.bf16.mxu0 0
        %1203 = vmatpush1.bf16.xpose.msra.mxu0 0
        %1204 = vmatprep.subr.bf16.mxu0 0
        %1205 = vmatpush1.bf16.xpose.msra.mxu0 0
        %1206 = vmatprep.subr.bf16.mxu0 0
        %1207 = vmatpush1.bf16.xpose.msra.mxu0 0
        %1208 = vmatprep.subr.bf16.mxu0 0
        %1209 = vmatpush1.bf16.xpose.msra.mxu0 0
        %1210 = vmatprep.subr.bf16.mxu0 0
        %1211 = vmatpush1.bf16.xpose.msra.mxu0 0
        %1212 = vmatprep.subr.bf16.mxu0 0
        %1213 = vmatpush1.bf16.xpose.msra.mxu0 0
        %1214 = vmatprep.subr.bf16.mxu0 0
        %1215 = vmatpush1.bf16.xpose.msra.mxu0 0
        %1216 = vmatprep.subr.bf16.mxu0 0
        %1217 = vmatpush1.bf16.xpose.msra.mxu0 0
        %1218 = vmatprep.subr.bf16.mxu0 0
        %1219 = vmatpush1.bf16.xpose.msra.mxu0 0
        %1220 = vmatprep.subr.bf16.mxu0 0
        %1221 = vmatpush1.bf16.xpose.msra.mxu0 0
        %1222 = vmatprep.subr.bf16.mxu0 0
        %1223 = vmatpush1.bf16.xpose.msra.mxu0 0
        %1224 = vmatprep.subr.bf16.mxu0 0
        %1225 = vmatpush1.bf16.xpose.msra.mxu0 0
        %1226 = vmatprep.subr.bf16.mxu0 0
        %1227 = vmatpush1.bf16.xpose.msra.mxu0 0
        %1228 = vmatprep.subr.bf16.mxu0 0
        %1229 = vmatpush1.bf16.xpose.msra.mxu0 0
        %1230 = vmatprep.mubr.bf16.mxu0 0
        %1231 = vmatmul.mubr.bf16.gmra.mrb[0].mxu0 %v1193
        %v1232 = vpop.f32.mrb[0].mxu0
        %v1233 = vadd.f32 0.0, %v1232
        %v1234 = vpop.f32.mrb[0].mxu0
        %v1235 = vpop.f32.mrb[0].mxu0
        %v1236 = vadd.f32 0.0, %v1235
        %v1237 = vpop.f32.mrb[0].mxu0
        %1238 = vdwg.mxu0
        %v1239 = vmul.f32 %v1233, 0.17677669
        %v1240 = vmul.f32 %v1236, 0.17677669
        %v1242 = vlaneseq
        %v1243 = vshrl.u32 %v1242, 7
        %v1244 = vsub.s32 0, %v1243
        %v1245 = vrot.slane %v909, %v1244
        %v1247 = vadd.f32 %v1239, %v1245
        %v1248 = vadd.f32 %v1240, %v1245
        %vm1249 = vcmask 130048
        %v1250 = vsel %vm1249, %v1247, -inf
        %1251 = vmax.xlane.f32.xlu0 %v1250
        %v1252 = vpop.xlane.xlu0 %1251
        %v1253 = vsel %vm1249, %v1248, -inf
        %1254 = vmax.xlane.f32.xlu0 %v1253
        %v1255 = vpop.xlane.xlu0 %1254
        %v1256 = vsub.f32 %v1247, %v1252
        %v1257 = vsub.f32 %v1248, %v1255
        %v1258 = vmul.f32 %v1256, 1.442695
        %v1259 = vpow.pop %v1258
        %v1260 = vmul.f32 %v1257, 1.442695
        %v1261 = vpow.pop %v1260
        %v1262 = vsel %vm1249, %v1259, 0.0
        %1263 = vadd.xlane.f32.xlu0 %v1262
        %v1264 = vpop.xlane.xlu0 %1263
        %v1265 = vsel %vm1249, %v1261, 0.0
        %1266 = vadd.xlane.f32.xlu0 %v1265
        %v1267 = vpop.xlane.xlu0 %1266
        %v1268 = vrcp.pop %v1264
        %v1269 = vrcp.pop %v1267
        %v1270 = vmul.f32 %v1259, %v1268
        %v1271 = vmul.f32 %v1261, %v1269
        %v1272 = vpack.c.bf16 %v1271, %v1270
        %v1274 = vsel %vm1249, %v1272, 0
        %1276 = vmatprep.subr.bf16.mxu0 0
        %1277 = vmatpush1.bf16.msra.mxu0 %v1190
        %1278 = vmatprep.subr.bf16.mxu0 0
        %1279 = vmatpush1.bf16.msra.mxu0 0
        %1280 = vmatprep.subr.bf16.mxu0 0
        %1281 = vmatpush1.bf16.msra.mxu0 0
        %1282 = vmatprep.subr.bf16.mxu0 0
        %1283 = vmatpush1.bf16.msra.mxu0 0
        %1284 = vmatprep.subr.bf16.mxu0 0
        %1285 = vmatpush1.bf16.msra.mxu0 0
        %1286 = vmatprep.subr.bf16.mxu0 0
        %1287 = vmatpush1.bf16.msra.mxu0 0
        %1288 = vmatprep.subr.bf16.mxu0 0
        %1289 = vmatpush1.bf16.msra.mxu0 0
        %1290 = vmatprep.subr.bf16.mxu0 0
        %1291 = vmatpush1.bf16.msra.mxu0 0
        %1292 = vmatprep.subr.bf16.mxu0 0
        %1293 = vmatpush1.bf16.msra.mxu0 0
        %1294 = vmatprep.subr.bf16.mxu0 0
        %1295 = vmatpush1.bf16.msra.mxu0 0
        %1296 = vmatprep.subr.bf16.mxu0 0
        %1297 = vmatpush1.bf16.msra.mxu0 0
        %1298 = vmatprep.subr.bf16.mxu0 0
        %1299 = vmatpush1.bf16.msra.mxu0 0
        %1300 = vmatprep.subr.bf16.mxu0 0
        %1301 = vmatpush1.bf16.msra.mxu0 0
        %1302 = vmatprep.subr.bf16.mxu0 0
        %1303 = vmatpush1.bf16.msra.mxu0 0
        %1304 = vmatprep.subr.bf16.mxu0 0
        %1305 = vmatpush1.bf16.msra.mxu0 0
        %1306 = vmatprep.subr.bf16.mxu0 0
        %1307 = vmatpush1.bf16.msra.mxu0 0
        %1308 = vmatprep.mubr.bf16.mxu0 0
        %1309 = vmatmul.mubr.bf16.gmra.mrb[0].mxu0 %v1274
        %v1310 = vpop.f32.mrb[0].mxu0
        %v1311 = vadd.f32 0.0, %v1310
        %v1312 = vpop.f32.mrb[0].mxu0
        %v1313 = vpop.f32.mrb[0].mxu0
        %v1314 = vadd.f32 0.0, %v1313
        %v1315 = vpop.f32.mrb[0].mxu0
        %1316 = vdwg.mxu0
        %v1317 = vpack.c.bf16 %v1314, %v1311
        %1319 = vrot.lane.b32.xlu0 %v1188, 96
        %v1320 = vpop.permute.xlu0 %1319
        %1322 = vrot.lane.b32.xlu0 %v1189, 96
        %v1323 = vpop.permute.xlu0 %1322
        %v1325 = vsel %vm1191, %v1320, 0
        %v1328 = vsel %vm1191, %v1323, 0
        %1330 = vmatprep.subr.bf16.mxu0 0
        %1331 = vmatpush1.bf16.xpose.msra.mxu0 %v1328
        %1332 = vmatprep.subr.bf16.mxu0 0
        %1333 = vmatpush1.bf16.xpose.msra.mxu0 0
        %1334 = vmatprep.subr.bf16.mxu0 0
        %1335 = vmatpush1.bf16.xpose.msra.mxu0 0
        %1336 = vmatprep.subr.bf16.mxu0 0
        %1337 = vmatpush1.bf16.xpose.msra.mxu0 0
        %1338 = vmatprep.subr.bf16.mxu0 0
        %1339 = vmatpush1.bf16.xpose.msra.mxu0 0
        %1340 = vmatprep.subr.bf16.mxu0 0
        %1341 = vmatpush1.bf16.xpose.msra.mxu0 0
        %1342 = vmatprep.subr.bf16.mxu0 0
        %1343 = vmatpush1.bf16.xpose.msra.mxu0 0
        %1344 = vmatprep.subr.bf16.mxu0 0
        %1345 = vmatpush1.bf16.xpose.msra.mxu0 0
        %1346 = vmatprep.subr.bf16.mxu0 0
        %1347 = vmatpush1.bf16.xpose.msra.mxu0 0
        %1348 = vmatprep.subr.bf16.mxu0 0
        %1349 = vmatpush1.bf16.xpose.msra.mxu0 0
        %1350 = vmatprep.subr.bf16.mxu0 0
        %1351 = vmatpush1.bf16.xpose.msra.mxu0 0
        %1352 = vmatprep.subr.bf16.mxu0 0
        %1353 = vmatpush1.bf16.xpose.msra.mxu0 0
        %1354 = vmatprep.subr.bf16.mxu0 0
        %1355 = vmatpush1.bf16.xpose.msra.mxu0 0
        %1356 = vmatprep.subr.bf16.mxu0 0
        %1357 = vmatpush1.bf16.xpose.msra.mxu0 0
        %1358 = vmatprep.subr.bf16.mxu0 0
        %1359 = vmatpush1.bf16.xpose.msra.mxu0 0
        %1360 = vmatprep.subr.bf16.mxu0 0
        %1361 = vmatpush1.bf16.xpose.msra.mxu0 0
        %1362 = vmatprep.mubr.bf16.mxu0 0
        %1363 = vmatmul.mubr.bf16.gmra.mrb[0].mxu0 %v1325
        %v1364 = vpop.f32.mrb[0].mxu0
        %v1365 = vadd.f32 0.0, %v1364
        %v1366 = vpop.f32.mrb[0].mxu0
        %v1367 = vpop.f32.mrb[0].mxu0
        %v1368 = vadd.f32 0.0, %v1367
        %v1369 = vpop.f32.mrb[0].mxu0
        %1370 = vdwg.mxu0
        %v1371 = vmul.f32 %v1365, 0.17677669
        %v1372 = vmul.f32 %v1368, 0.17677669
        %v1373 = vadd.f32 %v1371, %v1245
        %v1374 = vadd.f32 %v1372, %v1245
        %v1375 = vsel %vm1249, %v1373, -inf
        %1376 = vmax.xlane.f32.xlu0 %v1375
        %v1377 = vpop.xlane.xlu0 %1376
        %v1378 = vsel %vm1249, %v1374, -inf
        %1379 = vmax.xlane.f32.xlu0 %v1378
        %v1380 = vpop.xlane.xlu0 %1379
        %v1381 = vsub.f32 %v1373, %v1377
        %v1382 = vsub.f32 %v1374, %v1380
        %v1383 = vmul.f32 %v1381, 1.442695
        %v1384 = vpow.pop %v1383
        %v1385 = vmul.f32 %v1382, 1.442695
        %v1386 = vpow.pop %v1385
        %v1387 = vsel %vm1249, %v1384, 0.0
        %1388 = vadd.xlane.f32.xlu0 %v1387
        %v1389 = vpop.xlane.xlu0 %1388
        %v1390 = vsel %vm1249, %v1386, 0.0
        %1391 = vadd.xlane.f32.xlu0 %v1390
        %v1392 = vpop.xlane.xlu0 %1391
        %v1393 = vrcp.pop %v1389
        %v1394 = vrcp.pop %v1392
        %v1395 = vmul.f32 %v1384, %v1393
        %v1396 = vmul.f32 %v1386, %v1394
        %v1397 = vpack.c.bf16 %v1396, %v1395
        %1399 = vrot.lane.b32.xlu0 %v1190, 96
        %v1400 = vpop.permute.xlu0 %1399
        %v1403 = vsel %vm1249, %v1397, 0
        %1405 = vmatprep.subr.bf16.mxu0 0
        %1406 = vmatpush1.bf16.msra.mxu0 %v1400
        %1407 = vmatprep.subr.bf16.mxu0 0
        %1408 = vmatpush1.bf16.msra.mxu0 0
        %1409 = vmatprep.subr.bf16.mxu0 0
        %1410 = vmatpush1.bf16.msra.mxu0 0
        %1411 = vmatprep.subr.bf16.mxu0 0
        %1412 = vmatpush1.bf16.msra.mxu0 0
        %1413 = vmatprep.subr.bf16.mxu0 0
        %1414 = vmatpush1.bf16.msra.mxu0 0
        %1415 = vmatprep.subr.bf16.mxu0 0
        %1416 = vmatpush1.bf16.msra.mxu0 0
        %1417 = vmatprep.subr.bf16.mxu0 0
        %1418 = vmatpush1.bf16.msra.mxu0 0
        %1419 = vmatprep.subr.bf16.mxu0 0
        %1420 = vmatpush1.bf16.msra.mxu0 0
        %1421 = vmatprep.subr.bf16.mxu0 0
        %1422 = vmatpush1.bf16.msra.mxu0 0
        %1423 = vmatprep.subr.bf16.mxu0 0
        %1424 = vmatpush1.bf16.msra.mxu0 0
        %1425 = vmatprep.subr.bf16.mxu0 0
        %1426 = vmatpush1.bf16.msra.mxu0 0
        %1427 = vmatprep.subr.bf16.mxu0 0
        %1428 = vmatpush1.bf16.msra.mxu0 0
        %1429 = vmatprep.subr.bf16.mxu0 0
        %1430 = vmatpush1.bf16.msra.mxu0 0
        %1431 = vmatprep.subr.bf16.mxu0 0
        %1432 = vmatpush1.bf16.msra.mxu0 0
        %1433 = vmatprep.subr.bf16.mxu0 0
        %1434 = vmatpush1.bf16.msra.mxu0 0
        %1435 = vmatprep.subr.bf16.mxu0 0
        %1436 = vmatpush1.bf16.msra.mxu0 0
        %1437 = vmatprep.mubr.bf16.mxu0 0
        %1438 = vmatmul.mubr.bf16.gmra.mrb[0].mxu0 %v1403
        %v1439 = vpop.f32.mrb[0].mxu0
        %v1440 = vadd.f32 0.0, %v1439
        %v1441 = vpop.f32.mrb[0].mxu0
        %v1442 = vpop.f32.mrb[0].mxu0
        %v1443 = vadd.f32 0.0, %v1442
        %v1444 = vpop.f32.mrb[0].mxu0
        %1445 = vdwg.mxu0
        %v1446 = vpack.c.bf16 %v1443, %v1440
        %v1451 = vunpack.c.l.b16 %v1176
        %v1452 = vunpack.c.l.b16 %v1177
        %v1453 = vunpack.c.l.b16 %v1178
        %v1454 = vunpack.c.l.b16 %v1179
        %v1455 = vpack.c.b16 %v1452, %v1451
        %v1456 = vpack.c.b16 %v1454, %v1453
        %v1460 = vsel %vm1191, %v1446, 0
        %1462 = vmatprep.subr.bf16.mxu0 0
        %1463 = vmatpush1.bf16.msra.mxu0 %v1455
        %1464 = vmatprep.subr.bf16.mxu0 0
        %1465 = vmatpush1.bf16.msra.mxu0 %v1456
        %1466 = vmatprep.subr.bf16.mxu0 0
        %1467 = vmatpush1.bf16.msra.mxu0 0
        %1468 = vmatprep.subr.bf16.mxu0 0
        %1469 = vmatpush1.bf16.msra.mxu0 0
        %1470 = vmatprep.subr.bf16.mxu0 0
        %1471 = vmatpush1.bf16.msra.mxu0 0
        %1472 = vmatprep.subr.bf16.mxu0 0
        %1473 = vmatpush1.bf16.msra.mxu0 0
        %1474 = vmatprep.subr.bf16.mxu0 0
        %1475 = vmatpush1.bf16.msra.mxu0 0
        %1476 = vmatprep.subr.bf16.mxu0 0
        %1477 = vmatpush1.bf16.msra.mxu0 0
        %1478 = vmatprep.subr.bf16.mxu0 0
        %1479 = vmatpush1.bf16.msra.mxu0 0
        %1480 = vmatprep.subr.bf16.mxu0 0
        %1481 = vmatpush1.bf16.msra.mxu0 0
        %1482 = vmatprep.subr.bf16.mxu0 0
        %1483 = vmatpush1.bf16.msra.mxu0 0
        %1484 = vmatprep.subr.bf16.mxu0 0
        %1485 = vmatpush1.bf16.msra.mxu0 0
        %1486 = vmatprep.subr.bf16.mxu0 0
        %1487 = vmatpush1.bf16.msra.mxu0 0
        %1488 = vmatprep.subr.bf16.mxu0 0
        %1489 = vmatpush1.bf16.msra.mxu0 0
        %1490 = vmatprep.subr.bf16.mxu0 0
        %1491 = vmatpush1.bf16.msra.mxu0 0
        %1492 = vmatprep.subr.bf16.mxu0 0
        %1493 = vmatpush1.bf16.msra.mxu0 0
        %1494 = vmatprep.mubr.bf16.mxu0 0
        %1495 = vmatmul.mubr.bf16.gmra.mrb[0].mxu0 %v1460
        %v1496 = vpop.f32.mrb[0].mxu0
        %v1497 = vadd.f32 0.0, %v1496
        %v1498 = vpop.f32.mrb[0].mxu0
        %v1499 = vpop.f32.mrb[0].mxu0
        %v1500 = vadd.f32 0.0, %v1499
        %v1501 = vpop.f32.mrb[0].mxu0
        %1502 = vdwg.mxu0
        %v1507 = vunpack.c.l.b16 %v1172
        %v1508 = vunpack.c.l.b16 %v1173
        %v1509 = vunpack.c.l.b16 %v1174
        %v1510 = vunpack.c.l.b16 %v1175
        %v1511 = vpack.c.b16 %v1508, %v1507
        %v1512 = vpack.c.b16 %v1510, %v1509
        %v1516 = vsel %vm1191, %v1317, 0
        %1518 = vmatprep.subr.bf16.mxu0 0
        %1519 = vmatpush1.bf16.msra.mxu0 %v1511
        %1520 = vmatprep.subr.bf16.mxu0 0
        %1521 = vmatpush1.bf16.msra.mxu0 %v1512
        %1522 = vmatprep.subr.bf16.mxu0 0
        %1523 = vmatpush1.bf16.msra.mxu0 0
        %1524 = vmatprep.subr.bf16.mxu0 0
        %1525 = vmatpush1.bf16.msra.mxu0 0
        %1526 = vmatprep.subr.bf16.mxu0 0
        %1527 = vmatpush1.bf16.msra.mxu0 0
        %1528 = vmatprep.subr.bf16.mxu0 0
        %1529 = vmatpush1.bf16.msra.mxu0 0
        %1530 = vmatprep.subr.bf16.mxu0 0
        %1531 = vmatpush1.bf16.msra.mxu0 0
        %1532 = vmatprep.subr.bf16.mxu0 0
        %1533 = vmatpush1.bf16.msra.mxu0 0
        %1534 = vmatprep.subr.bf16.mxu0 0
        %1535 = vmatpush1.bf16.msra.mxu0 0
        %1536 = vmatprep.subr.bf16.mxu0 0
        %1537 = vmatpush1.bf16.msra.mxu0 0
        %1538 = vmatprep.subr.bf16.mxu0 0
        %1539 = vmatpush1.bf16.msra.mxu0 0
        %1540 = vmatprep.subr.bf16.mxu0 0
        %1541 = vmatpush1.bf16.msra.mxu0 0
        %1542 = vmatprep.subr.bf16.mxu0 0
        %1543 = vmatpush1.bf16.msra.mxu0 0
        %1544 = vmatprep.subr.bf16.mxu0 0
        %1545 = vmatpush1.bf16.msra.mxu0 0
        %1546 = vmatprep.subr.bf16.mxu0 0
        %1547 = vmatpush1.bf16.msra.mxu0 0
        %1548 = vmatprep.subr.bf16.mxu0 0
        %1549 = vmatpush1.bf16.msra.mxu0 0
        %1550 = vmatprep.mubr.bf16.mxu0 0
        %1551 = vmatmul.mubr.bf16.gmra.mrb[0].mxu0 %v1516
        %v1552 = vpop.f32.mrb[0].mxu0
        %v1553 = vadd.f32 %v1497, %v1552
        %v1554 = vpop.f32.mrb[0].mxu0
        %v1555 = vpop.f32.mrb[0].mxu0
        %v1556 = vadd.f32 %v1500, %v1555
        %v1557 = vpop.f32.mrb[0].mxu0
        %1558 = vdwg.mxu0
        %1559 = vrot.lane.b32.xlu0 %v1188, 64
        %v1560 = vpop.permute.xlu0 %1559
        %1561 = vrot.lane.b32.xlu0 %v1189, 64
        %v1562 = vpop.permute.xlu0 %1561
        %v1564 = vsel %vm1191, %v1560, 0
        %v1567 = vsel %vm1191, %v1562, 0
        %1569 = vmatprep.subr.bf16.mxu0 0
        %1570 = vmatpush1.bf16.xpose.msra.mxu0 %v1567
        %1571 = vmatprep.subr.bf16.mxu0 0
        %1572 = vmatpush1.bf16.xpose.msra.mxu0 0
        %1573 = vmatprep.subr.bf16.mxu0 0
        %1574 = vmatpush1.bf16.xpose.msra.mxu0 0
        %1575 = vmatprep.subr.bf16.mxu0 0
        %1576 = vmatpush1.bf16.xpose.msra.mxu0 0
        %1577 = vmatprep.subr.bf16.mxu0 0
        %1578 = vmatpush1.bf16.xpose.msra.mxu0 0
        %1579 = vmatprep.subr.bf16.mxu0 0
        %1580 = vmatpush1.bf16.xpose.msra.mxu0 0
        %1581 = vmatprep.subr.bf16.mxu0 0
        %1582 = vmatpush1.bf16.xpose.msra.mxu0 0
        %1583 = vmatprep.subr.bf16.mxu0 0
        %1584 = vmatpush1.bf16.xpose.msra.mxu0 0
        %1585 = vmatprep.subr.bf16.mxu0 0
        %1586 = vmatpush1.bf16.xpose.msra.mxu0 0
        %1587 = vmatprep.subr.bf16.mxu0 0
        %1588 = vmatpush1.bf16.xpose.msra.mxu0 0
        %1589 = vmatprep.subr.bf16.mxu0 0
        %1590 = vmatpush1.bf16.xpose.msra.mxu0 0
        %1591 = vmatprep.subr.bf16.mxu0 0
        %1592 = vmatpush1.bf16.xpose.msra.mxu0 0
        %1593 = vmatprep.subr.bf16.mxu0 0
        %1594 = vmatpush1.bf16.xpose.msra.mxu0 0
        %1595 = vmatprep.subr.bf16.mxu0 0
        %1596 = vmatpush1.bf16.xpose.msra.mxu0 0
        %1597 = vmatprep.subr.bf16.mxu0 0
        %1598 = vmatpush1.bf16.xpose.msra.mxu0 0
        %1599 = vmatprep.subr.bf16.mxu0 0
        %1600 = vmatpush1.bf16.xpose.msra.mxu0 0
        %1601 = vmatprep.mubr.bf16.mxu0 0
        %1602 = vmatmul.mubr.bf16.gmra.mrb[0].mxu0 %v1564
        %v1603 = vpop.f32.mrb[0].mxu0
        %v1604 = vadd.f32 0.0, %v1603
        %v1605 = vpop.f32.mrb[0].mxu0
        %v1606 = vpop.f32.mrb[0].mxu0
        %v1607 = vadd.f32 0.0, %v1606
        %v1608 = vpop.f32.mrb[0].mxu0
        %1609 = vdwg.mxu0
        %v1610 = vmul.f32 %v1604, 0.17677669
        %v1611 = vmul.f32 %v1607, 0.17677669
        %v1612 = vadd.f32 %v1610, %v1245
        %v1613 = vadd.f32 %v1611, %v1245
        %v1614 = vsel %vm1249, %v1612, -inf
        %1615 = vmax.xlane.f32.xlu0 %v1614
        %v1616 = vpop.xlane.xlu0 %1615
        %v1617 = vsel %vm1249, %v1613, -inf
        %1618 = vmax.xlane.f32.xlu0 %v1617
        %v1619 = vpop.xlane.xlu0 %1618
        %v1620 = vsub.f32 %v1612, %v1616
        %v1621 = vsub.f32 %v1613, %v1619
        %v1622 = vmul.f32 %v1620, 1.442695
        %v1623 = vpow.pop %v1622
        %v1624 = vmul.f32 %v1621, 1.442695
        %v1625 = vpow.pop %v1624
        %v1626 = vsel %vm1249, %v1623, 0.0
        %1627 = vadd.xlane.f32.xlu0 %v1626
        %v1628 = vpop.xlane.xlu0 %1627
        %v1629 = vsel %vm1249, %v1625, 0.0
        %1630 = vadd.xlane.f32.xlu0 %v1629
        %v1631 = vpop.xlane.xlu0 %1630
        %v1632 = vrcp.pop %v1628
        %v1633 = vrcp.pop %v1631
        %v1634 = vmul.f32 %v1623, %v1632
        %v1635 = vmul.f32 %v1625, %v1633
        %v1636 = vpack.c.bf16 %v1635, %v1634
        %1637 = vrot.lane.b32.xlu0 %v1190, 64
        %v1638 = vpop.permute.xlu0 %1637
        %v1641 = vsel %vm1249, %v1636, 0
        %1643 = vmatprep.subr.bf16.mxu0 0
        %1644 = vmatpush1.bf16.msra.mxu0 %v1638
        %1645 = vmatprep.subr.bf16.mxu0 0
        %1646 = vmatpush1.bf16.msra.mxu0 0
        %1647 = vmatprep.subr.bf16.mxu0 0
        %1648 = vmatpush1.bf16.msra.mxu0 0
        %1649 = vmatprep.subr.bf16.mxu0 0
        %1650 = vmatpush1.bf16.msra.mxu0 0
        %1651 = vmatprep.subr.bf16.mxu0 0
        %1652 = vmatpush1.bf16.msra.mxu0 0
        %1653 = vmatprep.subr.bf16.mxu0 0
        %1654 = vmatpush1.bf16.msra.mxu0 0
        %1655 = vmatprep.subr.bf16.mxu0 0
        %1656 = vmatpush1.bf16.msra.mxu0 0
        %1657 = vmatprep.subr.bf16.mxu0 0
        %1658 = vmatpush1.bf16.msra.mxu0 0
        %1659 = vmatprep.subr.bf16.mxu0 0
        %1660 = vmatpush1.bf16.msra.mxu0 0
        %1661 = vmatprep.subr.bf16.mxu0 0
        %1662 = vmatpush1.bf16.msra.mxu0 0
        %1663 = vmatprep.subr.bf16.mxu0 0
        %1664 = vmatpush1.bf16.msra.mxu0 0
        %1665 = vmatprep.subr.bf16.mxu0 0
        %1666 = vmatpush1.bf16.msra.mxu0 0
        %1667 = vmatprep.subr.bf16.mxu0 0
        %1668 = vmatpush1.bf16.msra.mxu0 0
        %1669 = vmatprep.subr.bf16.mxu0 0
        %1670 = vmatpush1.bf16.msra.mxu0 0
        %1671 = vmatprep.subr.bf16.mxu0 0
        %1672 = vmatpush1.bf16.msra.mxu0 0
        %1673 = vmatprep.subr.bf16.mxu0 0
        %1674 = vmatpush1.bf16.msra.mxu0 0
        %1675 = vmatprep.mubr.bf16.mxu0 0
        %1676 = vmatmul.mubr.bf16.gmra.mrb[0].mxu0 %v1641
        %v1677 = vpop.f32.mrb[0].mxu0
        %v1678 = vadd.f32 0.0, %v1677
        %v1679 = vpop.f32.mrb[0].mxu0
        %v1680 = vpop.f32.mrb[0].mxu0
        %v1681 = vadd.f32 0.0, %v1680
        %v1682 = vpop.f32.mrb[0].mxu0
        %1683 = vdwg.mxu0
        %v1684 = vpack.c.bf16 %v1681, %v1678
        %v1689 = vunpack.c.l.b16 %v1180
        %v1690 = vunpack.c.l.b16 %v1181
        %v1691 = vunpack.c.l.b16 %v1182
        %v1692 = vunpack.c.l.b16 %v1183
        %v1693 = vpack.c.b16 %v1690, %v1689
        %v1694 = vpack.c.b16 %v1692, %v1691
        %v1698 = vsel %vm1191, %v1684, 0
        %1700 = vmatprep.subr.bf16.mxu0 0
        %1701 = vmatpush1.bf16.msra.mxu0 %v1693
        %1702 = vmatprep.subr.bf16.mxu0 0
        %1703 = vmatpush1.bf16.msra.mxu0 %v1694
        %1704 = vmatprep.subr.bf16.mxu0 0
        %1705 = vmatpush1.bf16.msra.mxu0 0
        %1706 = vmatprep.subr.bf16.mxu0 0
        %1707 = vmatpush1.bf16.msra.mxu0 0
        %1708 = vmatprep.subr.bf16.mxu0 0
        %1709 = vmatpush1.bf16.msra.mxu0 0
        %1710 = vmatprep.subr.bf16.mxu0 0
        %1711 = vmatpush1.bf16.msra.mxu0 0
        %1712 = vmatprep.subr.bf16.mxu0 0
        %1713 = vmatpush1.bf16.msra.mxu0 0
        %1714 = vmatprep.subr.bf16.mxu0 0
        %1715 = vmatpush1.bf16.msra.mxu0 0
        %1716 = vmatprep.subr.bf16.mxu0 0
        %1717 = vmatpush1.bf16.msra.mxu0 0
        %1718 = vmatprep.subr.bf16.mxu0 0
        %1719 = vmatpush1.bf16.msra.mxu0 0
        %1720 = vmatprep.subr.bf16.mxu0 0
        %1721 = vmatpush1.bf16.msra.mxu0 0
        %1722 = vmatprep.subr.bf16.mxu0 0
        %1723 = vmatpush1.bf16.msra.mxu0 0
        %1724 = vmatprep.subr.bf16.mxu0 0
        %1725 = vmatpush1.bf16.msra.mxu0 0
        %1726 = vmatprep.subr.bf16.mxu0 0
        %1727 = vmatpush1.bf16.msra.mxu0 0
        %1728 = vmatprep.subr.bf16.mxu0 0
        %1729 = vmatpush1.bf16.msra.mxu0 0
        %1730 = vmatprep.subr.bf16.mxu0 0
        %1731 = vmatpush1.bf16.msra.mxu0 0
        %1732 = vmatprep.mubr.bf16.mxu0 0
        %1733 = vmatmul.mubr.bf16.gmra.mrb[0].mxu0 %v1698
        %v1734 = vpop.f32.mrb[0].mxu0
        %v1735 = vadd.f32 0.0, %v1734
        %v1736 = vpop.f32.mrb[0].mxu0
        %v1737 = vpop.f32.mrb[0].mxu0
        %v1738 = vadd.f32 0.0, %v1737
        %v1739 = vpop.f32.mrb[0].mxu0
        %1740 = vdwg.mxu0
        %v1741 = vadd.f32 %v1553, %v1735
        %v1742 = vadd.f32 %v1556, %v1738
        %1743 = vrot.lane.b32.xlu0 %v1188, 32
        %v1744 = vpop.permute.xlu0 %1743
        %1745 = vrot.lane.b32.xlu0 %v1189, 32
        %v1746 = vpop.permute.xlu0 %1745
        %v1748 = vsel %vm1191, %v1744, 0
        %v1751 = vsel %vm1191, %v1746, 0
        %1753 = vmatprep.subr.bf16.mxu0 0
        %1754 = vmatpush1.bf16.xpose.msra.mxu0 %v1751
        %1755 = vmatprep.subr.bf16.mxu0 0
        %1756 = vmatpush1.bf16.xpose.msra.mxu0 0
        %1757 = vmatprep.subr.bf16.mxu0 0
        %1758 = vmatpush1.bf16.xpose.msra.mxu0 0
        %1759 = vmatprep.subr.bf16.mxu0 0
        %1760 = vmatpush1.bf16.xpose.msra.mxu0 0
        %1761 = vmatprep.subr.bf16.mxu0 0
        %1762 = vmatpush1.bf16.xpose.msra.mxu0 0
        %1763 = vmatprep.subr.bf16.mxu0 0
        %1764 = vmatpush1.bf16.xpose.msra.mxu0 0
        %1765 = vmatprep.subr.bf16.mxu0 0
        %1766 = vmatpush1.bf16.xpose.msra.mxu0 0
        %1767 = vmatprep.subr.bf16.mxu0 0
        %1768 = vmatpush1.bf16.xpose.msra.mxu0 0
        %1769 = vmatprep.subr.bf16.mxu0 0
        %1770 = vmatpush1.bf16.xpose.msra.mxu0 0
        %1771 = vmatprep.subr.bf16.mxu0 0
        %1772 = vmatpush1.bf16.xpose.msra.mxu0 0
        %1773 = vmatprep.subr.bf16.mxu0 0
        %1774 = vmatpush1.bf16.xpose.msra.mxu0 0
        %1775 = vmatprep.subr.bf16.mxu0 0
        %1776 = vmatpush1.bf16.xpose.msra.mxu0 0
        %1777 = vmatprep.subr.bf16.mxu0 0
        %1778 = vmatpush1.bf16.xpose.msra.mxu0 0
        %1779 = vmatprep.subr.bf16.mxu0 0
        %1780 = vmatpush1.bf16.xpose.msra.mxu0 0
        %1781 = vmatprep.subr.bf16.mxu0 0
        %1782 = vmatpush1.bf16.xpose.msra.mxu0 0
        %1783 = vmatprep.subr.bf16.mxu0 0
        %1784 = vmatpush1.bf16.xpose.msra.mxu0 0
        %1785 = vmatprep.mubr.bf16.mxu0 0
        %1786 = vmatmul.mubr.bf16.gmra.mrb[0].mxu0 %v1748
        %v1787 = vpop.f32.mrb[0].mxu0
        %v1788 = vadd.f32 0.0, %v1787
        %v1789 = vpop.f32.mrb[0].mxu0
        %v1790 = vpop.f32.mrb[0].mxu0
        %v1791 = vadd.f32 0.0, %v1790
        %v1792 = vpop.f32.mrb[0].mxu0
        %1793 = vdwg.mxu0
        %v1794 = vmul.f32 %v1788, 0.17677669
        %v1795 = vmul.f32 %v1791, 0.17677669
        %v1796 = vadd.f32 %v1794, %v1245
        %v1797 = vadd.f32 %v1795, %v1245
        %v1798 = vsel %vm1249, %v1796, -inf
        %1799 = vmax.xlane.f32.xlu0 %v1798
        %v1800 = vpop.xlane.xlu0 %1799
        %v1801 = vsel %vm1249, %v1797, -inf
        %1802 = vmax.xlane.f32.xlu0 %v1801
        %v1803 = vpop.xlane.xlu0 %1802
        %v1804 = vsub.f32 %v1796, %v1800
        %v1805 = vsub.f32 %v1797, %v1803
        %v1806 = vmul.f32 %v1804, 1.442695
        %v1807 = vpow.pop %v1806
        %v1808 = vmul.f32 %v1805, 1.442695
        %v1809 = vpow.pop %v1808
        %v1810 = vsel %vm1249, %v1807, 0.0
        %1811 = vadd.xlane.f32.xlu0 %v1810
        %v1812 = vpop.xlane.xlu0 %1811
        %v1813 = vsel %vm1249, %v1809, 0.0
        %1814 = vadd.xlane.f32.xlu0 %v1813
        %v1815 = vpop.xlane.xlu0 %1814
        %v1816 = vrcp.pop %v1812
        %v1817 = vrcp.pop %v1815
        %v1818 = vmul.f32 %v1807, %v1816
        %v1819 = vmul.f32 %v1809, %v1817
        %v1820 = vpack.c.bf16 %v1819, %v1818
        %1821 = vrot.lane.b32.xlu0 %v1190, 32
        %v1822 = vpop.permute.xlu0 %1821
        %v1825 = vsel %vm1249, %v1820, 0
        %1827 = vmatprep.subr.bf16.mxu0 0
        %1828 = vmatpush1.bf16.msra.mxu0 %v1822
        %1829 = vmatprep.subr.bf16.mxu0 0
        %1830 = vmatpush1.bf16.msra.mxu0 0
        %1831 = vmatprep.subr.bf16.mxu0 0
        %1832 = vmatpush1.bf16.msra.mxu0 0
        %1833 = vmatprep.subr.bf16.mxu0 0
        %1834 = vmatpush1.bf16.msra.mxu0 0
        %1835 = vmatprep.subr.bf16.mxu0 0
        %1836 = vmatpush1.bf16.msra.mxu0 0
        %1837 = vmatprep.subr.bf16.mxu0 0
        %1838 = vmatpush1.bf16.msra.mxu0 0
        %1839 = vmatprep.subr.bf16.mxu0 0
        %1840 = vmatpush1.bf16.msra.mxu0 0
        %1841 = vmatprep.subr.bf16.mxu0 0
        %1842 = vmatpush1.bf16.msra.mxu0 0
        %1843 = vmatprep.subr.bf16.mxu0 0
        %1844 = vmatpush1.bf16.msra.mxu0 0
        %1845 = vmatprep.subr.bf16.mxu0 0
        %1846 = vmatpush1.bf16.msra.mxu0 0
        %1847 = vmatprep.subr.bf16.mxu0 0
        %1848 = vmatpush1.bf16.msra.mxu0 0
        %1849 = vmatprep.subr.bf16.mxu0 0
        %1850 = vmatpush1.bf16.msra.mxu0 0
        %1851 = vmatprep.subr.bf16.mxu0 0
        %1852 = vmatpush1.bf16.msra.mxu0 0
        %1853 = vmatprep.subr.bf16.mxu0 0
        %1854 = vmatpush1.bf16.msra.mxu0 0
        %1855 = vmatprep.subr.bf16.mxu0 0
        %1856 = vmatpush1.bf16.msra.mxu0 0
        %1857 = vmatprep.subr.bf16.mxu0 0
        %1858 = vmatpush1.bf16.msra.mxu0 0
        %1859 = vmatprep.mubr.bf16.mxu0 0
        %1860 = vmatmul.mubr.bf16.gmra.mrb[0].mxu0 %v1825
        %v1861 = vpop.f32.mrb[0].mxu0
        %v1862 = vadd.f32 0.0, %v1861
        %v1863 = vpop.f32.mrb[0].mxu0
        %v1864 = vpop.f32.mrb[0].mxu0
        %v1865 = vadd.f32 0.0, %v1864
        %v1866 = vpop.f32.mrb[0].mxu0
        %1867 = vdwg.mxu0
        %v1868 = vpack.c.bf16 %v1865, %v1862
        %v1873 = vunpack.c.l.b16 %v1184
        %v1874 = vunpack.c.l.b16 %v1185
        %v1875 = vunpack.c.l.b16 %v1186
        %v1876 = vunpack.c.l.b16 %v1187
        %v1877 = vpack.c.b16 %v1874, %v1873
        %v1878 = vpack.c.b16 %v1876, %v1875
        %v1882 = vsel %vm1191, %v1868, 0
        %1884 = vmatprep.subr.bf16.mxu0 0
        %1885 = vmatpush1.bf16.msra.mxu0 %v1877
        %1886 = vmatprep.subr.bf16.mxu0 0
        %1887 = vmatpush1.bf16.msra.mxu0 %v1878
        %1888 = vmatprep.subr.bf16.mxu0 0
        %1889 = vmatpush1.bf16.msra.mxu0 0
        %1890 = vmatprep.subr.bf16.mxu0 0
        %1891 = vmatpush1.bf16.msra.mxu0 0
        %1892 = vmatprep.subr.bf16.mxu0 0
        %1893 = vmatpush1.bf16.msra.mxu0 0
        %1894 = vmatprep.subr.bf16.mxu0 0
        %1895 = vmatpush1.bf16.msra.mxu0 0
        %1896 = vmatprep.subr.bf16.mxu0 0
        %1897 = vmatpush1.bf16.msra.mxu0 0
        %1898 = vmatprep.subr.bf16.mxu0 0
        %1899 = vmatpush1.bf16.msra.mxu0 0
        %1900 = vmatprep.subr.bf16.mxu0 0
        %1901 = vmatpush1.bf16.msra.mxu0 0
        %1902 = vmatprep.subr.bf16.mxu0 0
        %1903 = vmatpush1.bf16.msra.mxu0 0
        %1904 = vmatprep.subr.bf16.mxu0 0
        %1905 = vmatpush1.bf16.msra.mxu0 0
        %1906 = vmatprep.subr.bf16.mxu0 0
        %1907 = vmatpush1.bf16.msra.mxu0 0
        %1908 = vmatprep.subr.bf16.mxu0 0
        %1909 = vmatpush1.bf16.msra.mxu0 0
        %1910 = vmatprep.subr.bf16.mxu0 0
        %1911 = vmatpush1.bf16.msra.mxu0 0
        %1912 = vmatprep.subr.bf16.mxu0 0
        %1913 = vmatpush1.bf16.msra.mxu0 0
        %1914 = vmatprep.subr.bf16.mxu0 0
        %1915 = vmatpush1.bf16.msra.mxu0 0
        %1916 = vmatprep.mubr.bf16.mxu0 0
        %1917 = vmatmul.mubr.bf16.gmra.mrb[0].mxu0 %v1882
        %v1918 = vpop.f32.mrb[0].mxu0
        %v1919 = vadd.f32 0.0, %v1918
        %v1920 = vpop.f32.mrb[0].mxu0
        %v1921 = vpop.f32.mrb[0].mxu0
        %v1922 = vadd.f32 0.0, %v1921
        %v1923 = vpop.f32.mrb[0].mxu0
        %1924 = vdwg.mxu0
        %v1925 = vadd.f32 %v1741, %v1919
        %v1926 = vadd.f32 %v1742, %v1922
        %v1927 = vld [vmem:[%s715] sm:$0x1]
        %v1929 = vlaneseq
        %v1930 = vshrl.u32 %v1929, 7
        %v1931 = vsub.s32 0, %v1930
        %v1932 = vrot.slane %v1927, %v1931
        %v1934 = vadd.f32 %v1925, %v1932
        %v1935 = vadd.f32 %v1926, %v1932
        %v1936 = vadd.f32 %v907, %v1934
        %v1937 = vadd.f32 %v908, %v1935
        %v1938 = vld [vmem:[%s723] sm:$0x1]
        %v1939 = vld [vmem:[%s731] sm:$0x1]
        %1940 = vadd.xlane.f32.xlu0 %v1936
        %v1941 = vpop.xlane.xlu0 %1940
        %1942 = vadd.xlane.f32.xlu0 %v1937
        %v1943 = vpop.xlane.xlu0 %1942
        %v1944 = vrcp.pop 128.0
        %v1945 = vmul.f32 %v1941, %v1944
        %v1946 = vmul.f32 %v1943, %v1944
        %v1947 = vsub.f32 %v1936, %v1945
        %v1948 = vsub.f32 %v1937, %v1946
        %v1949 = vmul.f32 %v1947, %v1947
        %v1950 = vmul.f32 %v1948, %v1948
        %1951 = vadd.xlane.f32.xlu0 %v1949
        %v1952 = vpop.xlane.xlu0 %1951
        %1953 = vadd.xlane.f32.xlu0 %v1950
        %v1954 = vpop.xlane.xlu0 %1953
        %v1955 = vmul.f32 %v1952, %v1944
        %v1956 = vmul.f32 %v1954, %v1944
        %v1957 = vadd.f32 %v1955, 1e-12
        %v1958 = vadd.f32 %v1956, 1e-12
        %v1959 = vrsqrt.pop %v1957
        %v1960 = vrsqrt.pop %v1958
        %v1961 = vmul.f32 %v1947, %v1959
        %v1962 = vmul.f32 %v1948, %v1960
        %v1964 = vlaneseq
        %v1965 = vshrl.u32 %v1964, 7
        %v1966 = vsub.s32 0, %v1965
        %v1967 = vrot.slane %v1938, %v1966
        %v1969 = vmul.f32 %v1961, %v1967
        %v1970 = vmul.f32 %v1962, %v1967
        %v1972 = vlaneseq
        %v1973 = vshrl.u32 %v1972, 7
        %v1974 = vsub.s32 0, %v1973
        %v1975 = vrot.slane %v1939, %v1974
        %v1977 = vadd.f32 %v1969, %v1975
        %v1978 = vadd.f32 %v1970, %v1975
        %v1979 = vpack.c.bf16 %v1978, %v1977
        %v1980 = vld [vmem:[%s740] sm:$0xff]
        %v1981 = vld [vmem:[%s740 + $0x8] sm:$0xff]
        %v1982 = vld [vmem:[%s740 + $0x10] sm:$0xff]
        %v1983 = vld [vmem:[%s740 + $0x18] sm:$0xff]
        %v1984 = vld [vmem:[%s740 + $0x20] sm:$0xff]
        %v1985 = vld [vmem:[%s740 + $0x28] sm:$0xff]
        %v1986 = vld [vmem:[%s740 + $0x30] sm:$0xff]
        %v1987 = vld [vmem:[%s740 + $0x38] sm:$0xff]
        %v1988 = vld [vmem:[%s740 + $0x40] sm:$0xff]
        %v1989 = vld [vmem:[%s740 + $0x48] sm:$0xff]
        %v1990 = vld [vmem:[%s740 + $0x50] sm:$0xff]
        %v1991 = vld [vmem:[%s740 + $0x58] sm:$0xff]
        %v1992 = vld [vmem:[%s740 + $0x60] sm:$0xff]
        %v1993 = vld [vmem:[%s740 + $0x68] sm:$0xff]
        %v1994 = vld [vmem:[%s740 + $0x70] sm:$0xff]
        %v1995 = vld [vmem:[%s740 + $0x78] sm:$0xff]
        %v1996 = vld [vmem:[%s890] sm:$0x3]
        %v1998 = vlaneseq
        %v1999 = vshrl.u32 %v1998, 7
        %v2000 = vsub.s32 0, %v1999
        %v2001 = vrot.slane %v1996, %v2000
        %v2002 = vlaneseq
        %v2003 = vshrl.u32 %v2002, 7
        %v2004 = vsub.s32 1, %v2003
        %v2005 = vrot.slane %v1996, %v2004
        %v2024 = vunpack.c.l.b16 %v1980
        %v2025 = vunpack.c.h.b16 %v1980
        %v2026 = vunpack.c.l.b16 %v1981
        %v2027 = vunpack.c.h.b16 %v1981
        %v2028 = vunpack.c.l.b16 %v1982
        %v2029 = vunpack.c.h.b16 %v1982
        %v2030 = vunpack.c.l.b16 %v1983
        %v2031 = vunpack.c.h.b16 %v1983
        %v2032 = vunpack.c.l.b16 %v1984
        %v2033 = vunpack.c.h.b16 %v1984
        %v2034 = vunpack.c.l.b16 %v1985
        %v2035 = vunpack.c.h.b16 %v1985
        %v2036 = vunpack.c.l.b16 %v1986
        %v2037 = vunpack.c.h.b16 %v1986
        %v2038 = vunpack.c.l.b16 %v1987
        %v2039 = vunpack.c.h.b16 %v1987
        %v2040 = vunpack.c.l.b16 %v1988
        %v2041 = vunpack.c.h.b16 %v1988
        %v2042 = vunpack.c.l.b16 %v1989
        %v2043 = vunpack.c.h.b16 %v1989
        %v2044 = vunpack.c.l.b16 %v1990
        %v2045 = vunpack.c.h.b16 %v1990
        %v2046 = vunpack.c.l.b16 %v1991
        %v2047 = vunpack.c.h.b16 %v1991
        %v2048 = vunpack.c.l.b16 %v1992
        %v2049 = vunpack.c.h.b16 %v1992
        %v2050 = vunpack.c.l.b16 %v1993
        %v2051 = vunpack.c.h.b16 %v1993
        %v2052 = vunpack.c.l.b16 %v1994
        %v2053 = vunpack.c.h.b16 %v1994
        %v2054 = vunpack.c.l.b16 %v1995
        %v2055 = vunpack.c.h.b16 %v1995
        %v2056 = vpack.c.b16 %v2026, %v2024
        %v2057 = vpack.c.b16 %v2027, %v2025
        %v2058 = vpack.c.b16 %v2030, %v2028
        %v2059 = vpack.c.b16 %v2031, %v2029
        %v2060 = vpack.c.b16 %v2034, %v2032
        %v2061 = vpack.c.b16 %v2035, %v2033
        %v2062 = vpack.c.b16 %v2038, %v2036
        %v2063 = vpack.c.b16 %v2039, %v2037
        %v2064 = vpack.c.b16 %v2042, %v2040
        %v2065 = vpack.c.b16 %v2043, %v2041
        %v2066 = vpack.c.b16 %v2046, %v2044
        %v2067 = vpack.c.b16 %v2047, %v2045
        %v2068 = vpack.c.b16 %v2050, %v2048
        %v2069 = vpack.c.b16 %v2051, %v2049
        %v2070 = vpack.c.b16 %v2054, %v2052
        %v2071 = vpack.c.b16 %v2055, %v2053
        %2088 = vmatprep.subr.bf16.mxu0 %v2057
        %2089 = vmatpush1.bf16.msra.mxu0 %v2056
        %2090 = vmatprep.subr.bf16.mxu0 %v2059
        %2091 = vmatpush1.bf16.msra.mxu0 %v2058
        %2092 = vmatprep.subr.bf16.mxu0 %v2061
        %2093 = vmatpush1.bf16.msra.mxu0 %v2060
        %2094 = vmatprep.subr.bf16.mxu0 %v2063
        %2095 = vmatpush1.bf16.msra.mxu0 %v2062
        %2096 = vmatprep.subr.bf16.mxu0 %v2065
        %2097 = vmatpush1.bf16.msra.mxu0 %v2064
        %2098 = vmatprep.subr.bf16.mxu0 %v2067
        %2099 = vmatpush1.bf16.msra.mxu0 %v2066
        %2100 = vmatprep.subr.bf16.mxu0 %v2069
        %2101 = vmatpush1.bf16.msra.mxu0 %v2068
        %2102 = vmatprep.subr.bf16.mxu0 %v2071
        %2103 = vmatpush1.bf16.msra.mxu0 %v2070
        %2104 = vmatprep.subr.bf16.mxu0 0
        %2105 = vmatpush1.bf16.msra.mxu0 0
        %2106 = vmatprep.subr.bf16.mxu0 0
        %2107 = vmatpush1.bf16.msra.mxu0 0
        %2108 = vmatprep.subr.bf16.mxu0 0
        %2109 = vmatpush1.bf16.msra.mxu0 0
        %2110 = vmatprep.subr.bf16.mxu0 0
        %2111 = vmatpush1.bf16.msra.mxu0 0
        %2112 = vmatprep.subr.bf16.mxu0 0
        %2113 = vmatpush1.bf16.msra.mxu0 0
        %2114 = vmatprep.subr.bf16.mxu0 0
        %2115 = vmatpush1.bf16.msra.mxu0 0
        %2116 = vmatprep.subr.bf16.mxu0 0
        %2117 = vmatpush1.bf16.msra.mxu0 0
        %2118 = vmatprep.subr.bf16.mxu0 0
        %2119 = vmatpush1.bf16.msra.mxu0 0
        %2120 = vmatprep.mubr.bf16.mxu0 0
        %2121 = vmatmul.mubr.bf16.gmra.mrb[0].mxu0 %v1979
        %v2122 = vpop.f32.mrb[0].mxu0
        %v2123 = vadd.f32 %v2001, %v2122
        %v2124 = vpop.f32.mrb[0].mxu0
        %v2125 = vadd.f32 %v2005, %v2124
        %v2126 = vpop.f32.mrb[0].mxu0
        %v2127 = vadd.f32 %v2001, %v2126
        %v2128 = vpop.f32.mrb[0].mxu0
        %v2129 = vadd.f32 %v2005, %v2128
        %2130 = vdwg.mxu0
        %v2131 = vmul.f32 %v2123, 0.5
        %v2132 = vmul.f32 %v2125, 0.5
        %v2133 = vmul.f32 %v2127, 0.5
        %v2134 = vmul.f32 %v2129, 0.5
        %v2135 = vmul.f32 %v2123, 0.044715
        %v2136 = vmul.f32 %v2125, 0.044715
        %v2137 = vmul.f32 %v2127, 0.044715
        %v2138 = vmul.f32 %v2129, 0.044715
        %v2139 = vmul.f32 %v2135, %v2123
        %v2140 = vmul.f32 %v2136, %v2125
        %v2141 = vmul.f32 %v2137, %v2127
        %v2142 = vmul.f32 %v2138, %v2129
        %v2143 = vmul.f32 %v2139, %v2123
        %v2144 = vmul.f32 %v2140, %v2125
        %v2145 = vmul.f32 %v2141, %v2127
        %v2146 = vmul.f32 %v2142, %v2129
        %v2147 = vadd.f32 %v2123, %v2143
        %v2148 = vadd.f32 %v2125, %v2144
        %v2149 = vadd.f32 %v2127, %v2145
        %v2150 = vadd.f32 %v2129, %v2146
        %v2151 = vmul.f32 %v2147, 0.7978846
        %v2152 = vmul.f32 %v2148, 0.7978846
        %v2153 = vmul.f32 %v2149, 0.7978846
        %v2154 = vmul.f32 %v2150, 0.7978846
        %v2155 = vtanh.pop %v2151
        %v2156 = vtanh.pop %v2152
        %v2157 = vtanh.pop %v2153
        %v2158 = vtanh.pop %v2154
        %v2159 = vadd.f32 %v2155, 1.0
        %v2160 = vadd.f32 %v2156, 1.0
        %v2161 = vadd.f32 %v2157, 1.0
        %v2162 = vadd.f32 %v2158, 1.0
        %v2163 = vmul.f32 %v2131, %v2159
        %v2164 = vmul.f32 %v2132, %v2160
        %v2165 = vmul.f32 %v2133, %v2161
        %v2166 = vmul.f32 %v2134, %v2162
        %v2167 = vpack.c.bf16 %v2165, %v2163
        %v2168 = vpack.c.bf16 %v2166, %v2164
        %v2169 = vld [vmem:[%s749] sm:$0xf]
        %v2170 = vld [vmem:[%s749 + $0x4] sm:$0xf]
        %v2171 = vld [vmem:[%s749 + $0x8] sm:$0xf]
        %v2172 = vld [vmem:[%s749 + $0xc] sm:$0xf]
        %v2173 = vld [vmem:[%s749 + $0x10] sm:$0xf]
        %v2174 = vld [vmem:[%s749 + $0x14] sm:$0xf]
        %v2175 = vld [vmem:[%s749 + $0x18] sm:$0xf]
        %v2176 = vld [vmem:[%s749 + $0x1c] sm:$0xf]
        %v2177 = vld [vmem:[%s749 + $0x20] sm:$0xf]
        %v2178 = vld [vmem:[%s749 + $0x24] sm:$0xf]
        %v2179 = vld [vmem:[%s749 + $0x28] sm:$0xf]
        %v2180 = vld [vmem:[%s749 + $0x2c] sm:$0xf]
        %v2181 = vld [vmem:[%s749 + $0x30] sm:$0xf]
        %v2182 = vld [vmem:[%s749 + $0x34] sm:$0xf]
        %v2183 = vld [vmem:[%s749 + $0x38] sm:$0xf]
        %v2184 = vld [vmem:[%s749 + $0x3c] sm:$0xf]
        %v2185 = vld [vmem:[%s749 + $0x40] sm:$0xf]
        %v2186 = vld [vmem:[%s749 + $0x44] sm:$0xf]
        %v2187 = vld [vmem:[%s749 + $0x48] sm:$0xf]
        %v2188 = vld [vmem:[%s749 + $0x4c] sm:$0xf]
        %v2189 = vld [vmem:[%s749 + $0x50] sm:$0xf]
        %v2190 = vld [vmem:[%s749 + $0x54] sm:$0xf]
        %v2191 = vld [vmem:[%s749 + $0x58] sm:$0xf]
        %v2192 = vld [vmem:[%s749 + $0x5c] sm:$0xf]
        %v2193 = vld [vmem:[%s749 + $0x60] sm:$0xf]
        %v2194 = vld [vmem:[%s749 + $0x64] sm:$0xf]
        %v2195 = vld [vmem:[%s749 + $0x68] sm:$0xf]
        %v2196 = vld [vmem:[%s749 + $0x6c] sm:$0xf]
        %v2197 = vld [vmem:[%s749 + $0x70] sm:$0xf]
        %v2198 = vld [vmem:[%s749 + $0x74] sm:$0xf]
        %v2199 = vld [vmem:[%s749 + $0x78] sm:$0xf]
        %v2200 = vld [vmem:[%s749 + $0x7c] sm:$0xf]
        %v2201 = vld [vmem:[%s893] sm:$0x1]
        %v2203 = vlaneseq
        %v2204 = vshrl.u32 %v2203, 7
        %v2205 = vsub.s32 0, %v2204
        %v2206 = vrot.slane %v2201, %v2205
        %v2240 = vunpack.c.l.b16 %v2169
        %v2241 = vunpack.c.l.b16 %v2170
        %v2242 = vunpack.c.l.b16 %v2171
        %v2243 = vunpack.c.l.b16 %v2172
        %v2244 = vunpack.c.l.b16 %v2173
        %v2245 = vunpack.c.l.b16 %v2174
        %v2246 = vunpack.c.l.b16 %v2175
        %v2247 = vunpack.c.l.b16 %v2176
        %v2248 = vunpack.c.l.b16 %v2177
        %v2249 = vunpack.c.l.b16 %v2178
        %v2250 = vunpack.c.l.b16 %v2179
        %v2251 = vunpack.c.l.b16 %v2180
        %v2252 = vunpack.c.l.b16 %v2181
        %v2253 = vunpack.c.l.b16 %v2182
        %v2254 = vunpack.c.l.b16 %v2183
        %v2255 = vunpack.c.l.b16 %v2184
        %v2256 = vunpack.c.l.b16 %v2185
        %v2257 = vunpack.c.l.b16 %v2186
        %v2258 = vunpack.c.l.b16 %v2187
        %v2259 = vunpack.c.l.b16 %v2188
        %v2260 = vunpack.c.l.b16 %v2189
        %v2261 = vunpack.c.l.b16 %v2190
        %v2262 = vunpack.c.l.b16 %v2191
        %v2263 = vunpack.c.l.b16 %v2192
        %v2264 = vunpack.c.l.b16 %v2193
        %v2265 = vunpack.c.l.b16 %v2194
        %v2266 = vunpack.c.l.b16 %v2195
        %v2267 = vunpack.c.l.b16 %v2196
        %v2268 = vunpack.c.l.b16 %v2197
        %v2269 = vunpack.c.l.b16 %v2198
        %v2270 = vunpack.c.l.b16 %v2199
        %v2271 = vunpack.c.l.b16 %v2200
        %v2272 = vpack.c.b16 %v2241, %v2240
        %v2273 = vpack.c.b16 %v2243, %v2242
        %v2274 = vpack.c.b16 %v2245, %v2244
        %v2275 = vpack.c.b16 %v2247, %v2246
        %v2276 = vpack.c.b16 %v2249, %v2248
        %v2277 = vpack.c.b16 %v2251, %v2250
        %v2278 = vpack.c.b16 %v2253, %v2252
        %v2279 = vpack.c.b16 %v2255, %v2254
        %v2280 = vpack.c.b16 %v2257, %v2256
        %v2281 = vpack.c.b16 %v2259, %v2258
        %v2282 = vpack.c.b16 %v2261, %v2260
        %v2283 = vpack.c.b16 %v2263, %v2262
        %v2284 = vpack.c.b16 %v2265, %v2264
        %v2285 = vpack.c.b16 %v2267, %v2266
        %v2286 = vpack.c.b16 %v2269, %v2268
        %v2287 = vpack.c.b16 %v2271, %v2270
        %2304 = vmatprep.subr.bf16.mxu0 0
        %2305 = vmatpush1.bf16.msra.mxu0 %v2272
        %2306 = vmatprep.subr.bf16.mxu0 0
        %2307 = vmatpush1.bf16.msra.mxu0 %v2273
        %2308 = vmatprep.subr.bf16.mxu0 0
        %2309 = vmatpush1.bf16.msra.mxu0 %v2274
        %2310 = vmatprep.subr.bf16.mxu0 0
        %2311 = vmatpush1.bf16.msra.mxu0 %v2275
        %2312 = vmatprep.subr.bf16.mxu0 0
        %2313 = vmatpush1.bf16.msra.mxu0 %v2276
        %2314 = vmatprep.subr.bf16.mxu0 0
        %2315 = vmatpush1.bf16.msra.mxu0 %v2277
        %2316 = vmatprep.subr.bf16.mxu0 0
        %2317 = vmatpush1.bf16.msra.mxu0 %v2278
        %2318 = vmatprep.subr.bf16.mxu0 0
        %2319 = vmatpush1.bf16.msra.mxu0 %v2279
        %2320 = vmatprep.subr.bf16.mxu0 0
        %2321 = vmatpush1.bf16.msra.mxu0 %v2280
        %2322 = vmatprep.subr.bf16.mxu0 0
        %2323 = vmatpush1.bf16.msra.mxu0 %v2281
        %2324 = vmatprep.subr.bf16.mxu0 0
        %2325 = vmatpush1.bf16.msra.mxu0 %v2282
        %2326 = vmatprep.subr.bf16.mxu0 0
        %2327 = vmatpush1.bf16.msra.mxu0 %v2283
        %2328 = vmatprep.subr.bf16.mxu0 0
        %2329 = vmatpush1.bf16.msra.mxu0 %v2284
        %2330 = vmatprep.subr.bf16.mxu0 0
        %2331 = vmatpush1.bf16.msra.mxu0 %v2285
        %2332 = vmatprep.subr.bf16.mxu0 0
        %2333 = vmatpush1.bf16.msra.mxu0 %v2286
        %2334 = vmatprep.subr.bf16.mxu0 0
        %2335 = vmatpush1.bf16.msra.mxu0 %v2287
        %2336 = vmatprep.mubr.bf16.mxu0 %v2168
        %2337 = vmatmul.mubr.bf16.gmra.mrb[0].mxu0 %v2167
        %v2338 = vpop.f32.mrb[0].mxu0
        %v2339 = vadd.f32 %v2206, %v2338
        %v2340 = vpop.f32.mrb[0].mxu0
        %v2341 = vpop.f32.mrb[0].mxu0
        %v2342 = vadd.f32 %v2206, %v2341
        %v2343 = vpop.f32.mrb[0].mxu0
        %2344 = vdwg.mxu0
        %v2345 = vadd.f32 %v1977, %v2339
        %v2346 = vadd.f32 %v1978, %v2342
        %v2347 = vld [vmem:[%s757] sm:$0x1]
        %v2348 = vld [vmem:[%s765] sm:$0x1]
        %2349 = vadd.xlane.f32.xlu0 %v2345
        %v2350 = vpop.xlane.xlu0 %2349
        %2351 = vadd.xlane.f32.xlu0 %v2346
        %v2352 = vpop.xlane.xlu0 %2351
        %v2353 = vmul.f32 %v2350, %v1944
        %v2354 = vmul.f32 %v2352, %v1944
        %v2355 = vsub.f32 %v2345, %v2353
        %v2356 = vsub.f32 %v2346, %v2354
        %v2357 = vmul.f32 %v2355, %v2355
        %v2358 = vmul.f32 %v2356, %v2356
        %2359 = vadd.xlane.f32.xlu0 %v2357
        %v2360 = vpop.xlane.xlu0 %2359
        %2361 = vadd.xlane.f32.xlu0 %v2358
        %v2362 = vpop.xlane.xlu0 %2361
        %v2363 = vmul.f32 %v2360, %v1944
        %v2364 = vmul.f32 %v2362, %v1944
        %v2365 = vadd.f32 %v2363, 1e-12
        %v2366 = vadd.f32 %v2364, 1e-12
        %v2367 = vrsqrt.pop %v2365
        %v2368 = vrsqrt.pop %v2366
        %v2369 = vmul.f32 %v2355, %v2367
        %v2370 = vmul.f32 %v2356, %v2368
        %v2372 = vlaneseq
        %v2373 = vshrl.u32 %v2372, 7
        %v2374 = vsub.s32 0, %v2373
        %v2375 = vrot.slane %v2347, %v2374
        %v2377 = vmul.f32 %v2369, %v2375
        %v2378 = vmul.f32 %v2370, %v2375
        %v2380 = vlaneseq
        %v2381 = vshrl.u32 %v2380, 7
        %v2382 = vsub.s32 0, %v2381
        %v2383 = vrot.slane %v2348, %v2382
        %v2385 = vadd.f32 %v2377, %v2383
        %v2386 = vadd.f32 %v2378, %v2383
        %2387 = vst [vmem:[#allocation2] sm:$0xff] %v2385
        %2388 = vst [vmem:[#allocation2 + $0x8] sm:$0xff] %v2386
        %p2389 = scmp.eq.s32.totalorder %s47, 1
        // Predicated region
        $region121: #{life_advisor_forward.1} parent=83 // pred_check
          %p2390 = pneg %p2389
        $region122: #{life_advisor_forward.1} parent=83 // pred_check_branch
          %2392 = sbr.rel (%p2390) target = $region124
        $region123: #{life_advisor_forward.1} parent=83 // pred_region
          %v2393 = vpack.c.bf16 %v2385, %v2385
          %v2394 = vld [vmem:[%s14] sm:$0xf]
          %v2395 = vld [vmem:[%s14 + $0x4] sm:$0xf]
          %v2396 = vld [vmem:[%s14 + $0x8] sm:$0xf]
          %v2397 = vld [vmem:[%s14 + $0xc] sm:$0xf]
          %v2398 = vld [vmem:[%s14 + $0x10] sm:$0xf]
          %v2399 = vld [vmem:[%s14 + $0x14] sm:$0xf]
          %v2400 = vld [vmem:[%s14 + $0x18] sm:$0xf]
          %v2401 = vld [vmem:[%s14 + $0x1c] sm:$0xf]
          %v2402 = vld [vmem:[%s14 + $0x20] sm:$0xf]
          %v2403 = vld [vmem:[%s14 + $0x24] sm:$0xf]
          %v2404 = vld [vmem:[%s14 + $0x28] sm:$0xf]
          %v2405 = vld [vmem:[%s14 + $0x2c] sm:$0xf]
          %v2406 = vld [vmem:[%s14 + $0x30] sm:$0xf]
          %v2407 = vld [vmem:[%s14 + $0x34] sm:$0xf]
          %v2408 = vld [vmem:[%s14 + $0x38] sm:$0xf]
          %v2409 = vld [vmem:[%s14 + $0x3c] sm:$0xf]
          %v2410 = vld [vmem:[%s15] sm:$0x1]
          %v2412 = vlaneseq
          %v2413 = vshrl.u32 %v2412, 7
          %v2414 = vsub.s32 0, %v2413
          %v2415 = vrot.slane %v2410, %v2414
          %v2433 = vunpack.c.l.b16 %v2394
          %v2434 = vunpack.c.l.b16 %v2395
          %v2435 = vunpack.c.l.b16 %v2396
          %v2436 = vunpack.c.l.b16 %v2397
          %v2437 = vunpack.c.l.b16 %v2398
          %v2438 = vunpack.c.l.b16 %v2399
          %v2439 = vunpack.c.l.b16 %v2400
          %v2440 = vunpack.c.l.b16 %v2401
          %v2441 = vunpack.c.l.b16 %v2402
          %v2442 = vunpack.c.l.b16 %v2403
          %v2443 = vunpack.c.l.b16 %v2404
          %v2444 = vunpack.c.l.b16 %v2405
          %v2445 = vunpack.c.l.b16 %v2406
          %v2446 = vunpack.c.l.b16 %v2407
          %v2447 = vunpack.c.l.b16 %v2408
          %v2448 = vunpack.c.l.b16 %v2409
          %v2449 = vpack.c.b16 %v2434, %v2433
          %v2450 = vpack.c.b16 %v2436, %v2435
          %v2451 = vpack.c.b16 %v2438, %v2437
          %v2452 = vpack.c.b16 %v2440, %v2439
          %v2453 = vpack.c.b16 %v2442, %v2441
          %v2454 = vpack.c.b16 %v2444, %v2443
          %v2455 = vpack.c.b16 %v2446, %v2445
          %v2456 = vpack.c.b16 %v2448, %v2447
          %2465 = vmatprep.subr.bf16.mxu0 0
          %2466 = vmatpush1.bf16.msra.mxu0 %v2449
          %2467 = vmatprep.subr.bf16.mxu0 0
          %2468 = vmatpush1.bf16.msra.mxu0 %v2450
          %2469 = vmatprep.subr.bf16.mxu0 0
          %2470 = vmatpush1.bf16.msra.mxu0 %v2451
          %2471 = vmatprep.subr.bf16.mxu0 0
          %2472 = vmatpush1.bf16.msra.mxu0 %v2452
          %2473 = vmatprep.subr.bf16.mxu0 0
          %2474 = vmatpush1.bf16.msra.mxu0 %v2453
          %2475 = vmatprep.subr.bf16.mxu0 0
          %2476 = vmatpush1.bf16.msra.mxu0 %v2454
          %2477 = vmatprep.subr.bf16.mxu0 0
          %2478 = vmatpush1.bf16.msra.mxu0 %v2455
          %2479 = vmatprep.subr.bf16.mxu0 0
          %2480 = vmatpush1.bf16.msra.mxu0 %v2456
          %2481 = vmatprep.subr.bf16.mxu0 0
          %2482 = vmatpush1.bf16.msra.mxu0 0
          %2483 = vmatprep.subr.bf16.mxu0 0
          %2484 = vmatpush1.bf16.msra.mxu0 0
          %2485 = vmatprep.subr.bf16.mxu0 0
          %2486 = vmatpush1.bf16.msra.mxu0 0
          %2487 = vmatprep.subr.bf16.mxu0 0
          %2488 = vmatpush1.bf16.msra.mxu0 0
          %2489 = vmatprep.subr.bf16.mxu0 0
          %2490 = vmatpush1.bf16.msra.mxu0 0
          %2491 = vmatprep.subr.bf16.mxu0 0
          %2492 = vmatpush1.bf16.msra.mxu0 0
          %2493 = vmatprep.subr.bf16.mxu0 0
          %2494 = vmatpush1.bf16.msra.mxu0 0
          %2495 = vmatprep.subr.bf16.mxu0 0
          %2496 = vmatpush1.bf16.msra.mxu0 0
          %2497 = vmatprep.mubr.bf16.mxu0 0
          %2498 = vmatmul.mubr.bf16.gmra.mrb[0].mxu0 %v2393
          %v2499 = vpop.f32.mrb[0].mxu0
          %v2500 = vadd.f32 %v2415, %v2499
          %v2501 = vpop.f32.mrb[0].mxu0
          %v2502 = vpop.f32.mrb[0].mxu0
          %v2503 = vpop.f32.mrb[0].mxu0
          %2504 = vdwg.mxu0
          %2505 = vst [vmem:[%s897] sm:$0xff] %v2500
        $region124: #{life_advisor_forward.1} parent=83 // pred_fallthru
          _
        %p2506 = scmp.lt.s32.totalorder %s46, 1
        %s2507 = scalar_select %p2506, %s46, 1
        %s2508 = smul.addr %s2507, 8
        %s2509 = scalar_lea.vmem %s16, %s2508
        // Predicated region
        $region125: #{life_advisor_forward.1} parent=83 // pred_check
          %p2510 = pneg %p478
        $region126: #{life_advisor_forward.1} parent=83 // pred_check_branch
          %2512 = sbr.rel (%p2510) target = $region128
        $region127: #{life_advisor_forward.1} parent=83 // pred_region
          _
        $region128: #{life_advisor_forward.1} parent=83 // pred_fallthru
          _
      $region84: #{life_advisor_forward.1} parent=5 // pred_fallthru
        _
      %p2513 = scmp.le.s32.totalorder 2, %s37
      // Predicated region
      $region129: #{life_advisor_forward.1} parent=5 // pred_check
        %p2514 = pneg %p2513
      $region130: #{life_advisor_forward.1} parent=5 // pred_check_branch
        %2516 = sbr.rel (%p2514) target = $region132
      $region131: #{life_advisor_forward.1} parent=5 // pred_region
        %s2517 = ssub.s32 %s37, 2
        // Predicated region
        $region133: #{life_advisor_forward.1} parent=131 // pred_check
          %p2518 = pneg %p484
        $region134: #{life_advisor_forward.1} parent=131 // pred_check_branch
          %2520 = sbr.rel (%p2518) target = $region136
        $region135: #{life_advisor_forward.1} parent=131 // pred_region
          %p2521 = scmp.lt.s32.totalorder %s48, 1
          %s2522 = scalar_select %p2521, %s48, 1
          %s2523 = smul.addr %s2522, 8
          %s2524 = scalar_lea.vmem %s16, %s2523
        $region136: #{life_advisor_forward.1} parent=131 // pred_fallthru
          _
      $region132: #{life_advisor_forward.1} parent=5 // pred_fallthru
        _
    $region6: #{life_advisor_forward.1} parent=1 // loop_footer
      %s41 = sadd.s32 1, %s37
    $region7: #{life_advisor_forward.1} parent=1 // loop_footer_branch
      %36 = sbr.rel target = $region3
    $region8: #{life_advisor_forward.1} parent=1 // loop_exit
      _
    %2525 = vsyncpa [#allocation4], 1
    %s2526 = scalar_lea.sflag [#allocation4], 1
    %2527 = vsyncpa %s2526, 1
    %2528 = vsyncpa [#allocation6], 1
    %s2529 = scalar_lea.sflag [#allocation6], 1
    %2530 = vsyncpa %s2529, 1
    %2531 = vsyncpa [#allocation9], 1
    %s2532 = scalar_lea.sflag [#allocation9], 1
    %2533 = vsyncpa %s2532, 1
    %2534 = vsyncpa [#allocation12], 1
    %s2535 = scalar_lea.sflag [#allocation12], 1
    %2536 = vsyncpa %s2535, 1
    %2537 = vsyncpa [#allocation15], 1
    %s2538 = scalar_lea.sflag [#allocation15], 1
    %2539 = vsyncpa %s2538, 1

</llo_original>
